<compile_context>
chip_gen: v6e
topology: v6e:2x2x1
jax: 0.10.0
libtpu: 0.0.40
codegen_flags: <defaults>
</compile_context>

<pallas_src>
import functools
import math

import jax
import jax.numpy as jnp
from jax.experimental import pallas as pl
from jax.experimental.pallas import tpu as pltpu

EPS = 1e-12  # the module's LayerNorm uses eps=1e-12 inside the sqrt (TF style)


# ---------------------------------------------------------------------------
# Pallas kernel: one full ResidualAttentionBlock for one batch element
# ---------------------------------------------------------------------------
def _resblock_kernel(n_head,
                     x_ref, mask_ref,
                     ln1_g_ref, ln1_b_ref,
                     w_in_t_ref, b_in_ref,
                     w_out_t_ref, b_out_ref,
                     ln2_g_ref, ln2_b_ref,
                     w_fc_t_ref, b_fc_ref,
                     w_proj_t_ref, b_proj_ref,
                     o_ref):
    x = x_ref[0].astype(jnp.float32)    # (L, E) residual stream stays in f32
    mask = mask_ref[0]                  # (L, L) additive float mask (f32)
    L, E = x.shape
    Dh = E // n_head
    scale = 1.0 / math.sqrt(Dh)

    def layer_norm(v, g, b):            # f32 stats, rsqrt on the EUP
        u = jnp.mean(v, axis=-1, keepdims=True)
        c = v - u
        s = jnp.mean(c * c, axis=-1, keepdims=True)
        return g * (c * jax.lax.rsqrt(s + EPS)) + b

    def split_heads(t):                 # (L, E) f32 -> (H, L, Dh)
        return jnp.stack(
            [t[:, h * Dh:(h + 1) * Dh] for h in range(n_head)], axis=0)

    # ---- attention branch: x + MHA(ln_1(x)) ----
    h = layer_norm(x, ln1_g_ref[...], ln1_b_ref[...])               # (L, E) f32
    hb = h.astype(jnp.bfloat16)
    qkv = jnp.dot(hb, w_in_t_ref[...],
                  preferred_element_type=jnp.float32) + b_in_ref[...]   # (L, 3E) f32

    q = split_heads(qkv[:, :E] * scale).astype(jnp.bfloat16)        # (H, L, Dh)
    k = split_heads(qkv[:, E:2 * E]).astype(jnp.bfloat16)           # (H, L, Dh)
    v = split_heads(qkv[:, 2 * E:]).astype(jnp.bfloat16)            # (H, L, Dh)

    # Head-batched scores + single softmax (f32 stats).
    s = jnp.einsum('hld,hmd->hlm', q, k,
                   preferred_element_type=jnp.float32)              # (H, L, L)
    s = s + mask[None, :, :]
    s = s - jnp.max(s, axis=-1, keepdims=True)
    p = jnp.exp(s)
    p = p * pl.reciprocal(jnp.sum(p, axis=-1, keepdims=True), approx=True)

    o = jnp.einsum('hlm,hmd->hld', p.astype(jnp.bfloat16), v,
                   preferred_element_type=jnp.float32)              # (H, L, Dh)

    # Merge heads back to (L, E) and do a SINGLE dense output projection.
    o_merged = jnp.concatenate([o[hd] for hd in range(n_head)], axis=-1)
    attn = jnp.dot(o_merged.astype(jnp.bfloat16), w_out_t_ref[...],
                   preferred_element_type=jnp.float32) + b_out_ref[...]
    x1 = x + attn

    # ---- MLP branch: x + c_proj(QuickGELU(c_fc(ln_2(x)))) ----
    h2 = layer_norm(x1, ln2_g_ref[...], ln2_b_ref[...])
    m = jnp.dot(h2.astype(jnp.bfloat16), w_fc_t_ref[...],
                preferred_element_type=jnp.float32) + b_fc_ref[...]     # (L, 4E)
    m = m * jax.nn.sigmoid(1.702 * m)                                   # QuickGELU
    m2 = jnp.dot(m.astype(jnp.bfloat16), w_proj_t_ref[...],
                 preferred_element_type=jnp.float32) + b_proj_ref[...]  # (L, E)

    o_ref[0] = (x1 + m2).astype(o_ref.dtype)


# ---------------------------------------------------------------------------
# VMEM budget: explicit scoped limit (>= default 32 MiB, <= v7x physical 64 MiB)
# ---------------------------------------------------------------------------
def _vmem_limit_bytes(L, E, n_head, flat_ws):
    f32 = 4
    weight_bytes = sum(int(w.size) * w.dtype.itemsize for w in flat_ws)
    act_bytes = (4 * L * E * f32             # x / out blocks (double-buffered)
                 + 2 * L * L * f32           # mask block
                 + 2 * L * 3 * E * f32       # qkv + head-split copies
                 + 4 * n_head * L * L * f32  # scores / probs temporaries
                 + 3 * L * 4 * E * f32)      # MLP intermediate
    est = 2 * weight_bytes + 2 * act_bytes + (4 << 20)
    return int(min(max(est, 32 << 20), 64 << 20))


# ---------------------------------------------------------------------------
# Wrapper: one pallas_call per residual block, grid over batch (megacore-parallel)
# ---------------------------------------------------------------------------
def _run_block(x_nle, mask, flat_ws, n_head):
    N, L, E = x_nle.shape
    shared_mask = (mask.shape[0] == 1)
    mask_map = (lambda b: (0, 0, 0)) if shared_mask else (lambda b: (b, 0, 0))

    # Constant index_map: each weight is DMA'd once and stays resident in VMEM
    # across all batch grid steps.
    weight_specs = [pl.BlockSpec(w.shape, lambda b: (0, 0)) for w in flat_ws]

    return pl.pallas_call(
        functools.partial(_resblock_kernel, n_head),
        out_shape=jax.ShapeDtypeStruct((N, L, E), x_nle.dtype),
        grid=(N,),
        in_specs=[
            pl.BlockSpec((1, L, E), lambda b: (b, 0, 0)),
            pl.BlockSpec((1, L, L), mask_map),
            *weight_specs,
        ],
        out_specs=pl.BlockSpec((1, L, E), lambda b: (b, 0, 0)),
        compiler_params=pltpu.CompilerParams(
            dimension_semantics=("parallel",),
            vmem_limit_bytes=_vmem_limit_bytes(L, E, n_head, flat_ws),
        ),
    )(x_nle, mask, *flat_ws)


def prepare_params(params):
    """Host-side, once per model: pre-transpose weights, cast matmul weights to
    bf16, reshape biases / LayerNorm params to (1, dim) f32."""
    prepared = []
    for p in params:
        E = p["ln1_g"].shape[0]
        prepared.append([
            p["ln1_g"].reshape(1, E).astype(jnp.float32),
            p["ln1_b"].reshape(1, E).astype(jnp.float32),
            p["w_in"].T.astype(jnp.bfloat16),                 # (E, 3E)
            p["b_in"].reshape(1, 3 * E).astype(jnp.float32),
            p["w_out"].T.astype(jnp.bfloat16),                # (E, E)
            p["b_out"].reshape(1, E).astype(jnp.float32),
            p["ln2_g"].reshape(1, E).astype(jnp.float32),
            p["ln2_b"].reshape(1, E).astype(jnp.float32),
            p["w_fc"].T.astype(jnp.bfloat16),                 # (E, 4E)
            p["b_fc"].reshape(1, 4 * E).astype(jnp.float32),
            p["w_proj"].T.astype(jnp.bfloat16),               # (4E, E)
            p["b_proj"].reshape(1, E).astype(jnp.float32),
        ])
    return prepared


@functools.partial(jax.jit, static_argnums=3)
def transformer_clip_forward(x_lne, attn_mask, prepared_params, n_head):
    """x_lne: (L, N, E); attn_mask: (L, L) shared or (N, L, L) per batch.
    Returns (L, N, E)."""
    x = jnp.transpose(x_lne, (1, 0, 2))                        # -> (N, L, E)
    N, L, E = x.shape
    if attn_mask.ndim == 2:
        mask = attn_mask.astype(jnp.float32).reshape(1, L, L)  # shared: constant index_map
    else:
        mask = attn_mask.astype(jnp.float32)                   # per-batch (N, L, L)
    for flat_ws in prepared_params:
        x = _run_block(x, mask, flat_ws, n_head)
    return jnp.transpose(x, (1, 0, 2))


# ---------------------------------------------------------------------------
# Deterministic parameter init (shapes from the module's __init__)
# ---------------------------------------------------------------------------
def init_params(key, width, layers):
    params = []
    for _ in range(layers):
        key, k0, k1, k2, k3, k4, k5, k6, k7 = jax.random.split(key, 9)
        params.append({
            "w_in":  jax.random.normal(k0, (3 * width, width), jnp.float32) * 0.02,
            "b_in":  jax.random.normal(k1, (3 * width,), jnp.float32) * 0.02,
            "w_out": jax.random.normal(k2, (width, width), jnp.float32) * 0.02,
            "b_out": jax.random.normal(k3, (width,), jnp.float32) * 0.02,
            "ln1_g": jnp.ones((width,), jnp.float32),
            "ln1_b": jnp.zeros((width,), jnp.float32),
            "w_fc":  jax.random.normal(k4, (4 * width, width), jnp.float32) * 0.02,
            "b_fc":  jax.random.normal(k5, (4 * width,), jnp.float32) * 0.02,
            "w_proj": jax.random.normal(k6, (width, 4 * width), jnp.float32) * 0.02,
            "b_proj": jax.random.normal(k7, (width,), jnp.float32) * 0.02,
            "ln2_g": jnp.ones((width,), jnp.float32),
            "ln2_b": jnp.zeros((width,), jnp.float32),
        })
    return params


# ---------------------------------------------------------------------------
# Pure-JAX f32 reference (mirrors the PyTorch forward exactly) for validation
# ---------------------------------------------------------------------------
def _ref_block(x, mask, p, n_head):
    L, N, E = x.shape
    Dh = E // n_head

    def ln(v, g, b):
        u = v.mean(-1, keepdims=True)
        s = ((v - u) ** 2).mean(-1, keepdims=True)
        return g * ((v - u) / jnp.sqrt(s + EPS)) + b

    h = ln(x, p["ln1_g"], p["ln1_b"])
    qkv = h @ p["w_in"].T + p["b_in"]
    q, k, v = jnp.split(qkv, 3, axis=-1)

    def to_heads(t):
        return t.reshape(L, N, n_head, Dh).transpose(1, 2, 0, 3)  # (N,H,L,Dh)

    qh, kh, vh = map(to_heads, (q, k, v))
    if mask.ndim == 2:
        mask_b = mask[None, None, :, :]
    else:
        mask_b = mask[:, None, :, :]
    scores = jnp.einsum("nhld,nhmd->nhlm", qh, kh) / math.sqrt(Dh) + mask_b
    p_attn = jax.nn.softmax(scores, axis=-1)
    o = jnp.einsum("nhlm,nhmd->nhld", p_attn, vh)
    o = o.transpose(2, 0, 1, 3).reshape(L, N, E)
    attn = o @ p["w_out"].T + p["b_out"]
    x1 = x + attn
    h2 = ln(x1, p["ln2_g"], p["ln2_b"])
    m = h2 @ p["w_fc"].T + p["b_fc"]
    m = m * jax.nn.sigmoid(1.702 * m)
    m = m @ p["w_proj"].T + p["b_proj"]
    return x1 + m


def _ref_forward(x, mask, params, n_head):
    for p in params:
        x = _ref_block(x, mask, p, n_head)
    return x


# ---------------------------------------------------------------------------
if __name__ == "__main__":
    # Small shapes: seq L=8, batch N=2, width E=32, heads=4, layers=2
    L, N, E, HEADS, LAYERS = 8, 2, 32, 4, 2

    key = jax.random.PRNGKey(0)
    k_x, k_p = jax.random.split(key)

    x = jax.random.normal(k_x, (L, N, E), jnp.float32)          # (seq, batch, embed)
    # Per-batch causal additive attention mask (N, L, L) — the module's
    # attn_mask.repeat_interleave(n_head, dim=0) implies a per-batch mask.
    causal = jnp.where(
        jnp.tril(jnp.ones((L, L), jnp.bool_)), 0.0, -1e9
    ).astype(jnp.float32)
    attn_mask = jnp.broadcast_to(causal, (N, L, L))

    params = init_params(k_p, E, LAYERS)
    prepared = prepare_params(params)    # hoisted out of the forward path

    out = transformer_clip_forward(x, attn_mask, prepared, HEADS)
    out = jax.block_until_ready(out)

    ref = jax.block_until_ready(_ref_forward(x, attn_mask, params, HEADS))
    assert out.shape == (L, N, E)
    # bf16 matmuls (f32 accumulation) -> compare with a correspondingly looser tolerance.
    max_err = float(jnp.max(jnp.abs(out - ref)))
    assert jnp.allclose(out, ref, atol=2e-2, rtol=2e-2), (
        f"Pallas output mismatch vs reference (max abs err={max_err})")

    print("KERNEL_OK")
</pallas_src>

<mosaic_0001>
module attributes {stable_mosaic.version = 11 : i64} {
  func.func @_resblock_kernel(%arg0: i32, %arg1: memref<1x8x32xf32, #tpu.memory_space<vmem>>, %arg2: memref<1x8x8xf32, #tpu.memory_space<vmem>>, %arg3: memref<1x32xf32, #tpu.memory_space<vmem>>, %arg4: memref<1x32xf32, #tpu.memory_space<vmem>>, %arg5: memref<32x96xbf16, #tpu.memory_space<vmem>>, %arg6: memref<1x96xf32, #tpu.memory_space<vmem>>, %arg7: memref<32x32xbf16, #tpu.memory_space<vmem>>, %arg8: memref<1x32xf32, #tpu.memory_space<vmem>>, %arg9: memref<1x32xf32, #tpu.memory_space<vmem>>, %arg10: memref<1x32xf32, #tpu.memory_space<vmem>>, %arg11: memref<32x128xbf16, #tpu.memory_space<vmem>>, %arg12: memref<1x128xf32, #tpu.memory_space<vmem>>, %arg13: memref<128x32xbf16, #tpu.memory_space<vmem>>, %arg14: memref<1x32xf32, #tpu.memory_space<vmem>>, %arg15: memref<1x8x32xf32, #tpu.memory_space<vmem>>) attributes {dimension_semantics = [#tpu.dimension_semantics<parallel>], iteration_bounds = array<i64: 2>, scalar_prefetch = 0 : i64, scratch_operands = 0 : i64, tpu.core_type = #tpu.core_type<tc>, window_params = [{transform_indices = @transform_0, window_bounds = array<i64: 1, 8, 32>}, {transform_indices = @transform_1, window_bounds = array<i64: 1, 8, 8>}, {pipeline_mode = #tpu.pipeline_mode<synchronous>, transform_indices = @transform_2, window_bounds = array<i64: 1, 32>}, {pipeline_mode = #tpu.pipeline_mode<synchronous>, transform_indices = @transform_3, window_bounds = array<i64: 1, 32>}, {pipeline_mode = #tpu.pipeline_mode<synchronous>, transform_indices = @transform_4, window_bounds = array<i64: 32, 96>}, {pipeline_mode = #tpu.pipeline_mode<synchronous>, transform_indices = @transform_5, window_bounds = array<i64: 1, 96>}, {pipeline_mode = #tpu.pipeline_mode<synchronous>, transform_indices = @transform_6, window_bounds = array<i64: 32, 32>}, {pipeline_mode = #tpu.pipeline_mode<synchronous>, transform_indices = @transform_7, window_bounds = array<i64: 1, 32>}, {pipeline_mode = #tpu.pipeline_mode<synchronous>, transform_indices = @transform_8, window_bounds = array<i64: 1, 32>}, {pipeline_mode = #tpu.pipeline_mode<synchronous>, transform_indices = @transform_9, window_bounds = array<i64: 1, 32>}, {pipeline_mode = #tpu.pipeline_mode<synchronous>, transform_indices = @transform_10, window_bounds = array<i64: 32, 128>}, {pipeline_mode = #tpu.pipeline_mode<synchronous>, transform_indices = @transform_11, window_bounds = array<i64: 1, 128>}, {pipeline_mode = #tpu.pipeline_mode<synchronous>, transform_indices = @transform_12, window_bounds = array<i64: 128, 32>}, {pipeline_mode = #tpu.pipeline_mode<synchronous>, transform_indices = @transform_13, window_bounds = array<i64: 1, 32>}, {transform_indices = @transform_14, window_bounds = array<i64: 1, 8, 32>}]} {
    %c0 = arith.constant 0 : index
    %c0_0 = arith.constant 0 : index
    %c0_1 = arith.constant 0 : index
    %0 = vector.load %arg1[%c0, %c0_0, %c0_1] : memref<1x8x32xf32, #tpu.memory_space<vmem>>, vector<1x8x32xf32>
    %1 = vector.shape_cast %0 : vector<1x8x32xf32> to vector<8x32xf32>
    %c0_2 = arith.constant 0 : index
    %c0_3 = arith.constant 0 : index
    %c0_4 = arith.constant 0 : index
    %2 = vector.load %arg2[%c0_2, %c0_3, %c0_4] : memref<1x8x8xf32, #tpu.memory_space<vmem>>, vector<1x8x8xf32>
    %3 = vector.shape_cast %2 : vector<1x8x8xf32> to vector<8x8xf32>
    %c0_5 = arith.constant 0 : index
    %c0_6 = arith.constant 0 : index
    %4 = vector.load %arg3[%c0_5, %c0_6] : memref<1x32xf32, #tpu.memory_space<vmem>>, vector<1x32xf32>
    %c0_7 = arith.constant 0 : index
    %c0_8 = arith.constant 0 : index
    %5 = vector.load %arg4[%c0_7, %c0_8] : memref<1x32xf32, #tpu.memory_space<vmem>>, vector<1x32xf32>
    %cst = arith.constant dense<0.000000e+00> : vector<8xf32>
    %6 = vector.multi_reduction <add>, %1, %cst [1] : vector<8x32xf32> to vector<8xf32>
    %7 = vector.shape_cast %6 : vector<8xf32> to vector<8x1xf32>
    %cst_9 = arith.constant 3.200000e+01 : f32
    %8 = vector.broadcast %cst_9 : f32 to vector<8x1xf32>
    %9 = arith.divf %7, %8 : vector<8x1xf32>
    %10 = vector.broadcast %9 : vector<8x1xf32> to vector<8x32xf32>
    %11 = arith.subf %1, %10 : vector<8x32xf32>
    %12 = arith.mulf %11, %11 : vector<8x32xf32>
    %cst_10 = arith.constant dense<0.000000e+00> : vector<8xf32>
    %13 = vector.multi_reduction <add>, %12, %cst_10 [1] : vector<8x32xf32> to vector<8xf32>
    %14 = vector.shape_cast %13 : vector<8xf32> to vector<8x1xf32>
    %cst_11 = arith.constant 3.200000e+01 : f32
    %15 = vector.broadcast %cst_11 : f32 to vector<8x1xf32>
    %16 = arith.divf %14, %15 : vector<8x1xf32>
    %cst_12 = arith.constant 9.99999996E-13 : f32
    %17 = vector.broadcast %cst_12 : f32 to vector<8x1xf32>
    %18 = arith.addf %16, %17 : vector<8x1xf32>
    %19 = math.rsqrt %18 : vector<8x1xf32>
    %20 = vector.broadcast %19 : vector<8x1xf32> to vector<8x32xf32>
    %21 = arith.mulf %11, %20 : vector<8x32xf32>
    %22 = vector.broadcast %4 : vector<1x32xf32> to vector<8x32xf32>
    %23 = arith.mulf %22, %21 : vector<8x32xf32>
    %24 = vector.broadcast %5 : vector<1x32xf32> to vector<8x32xf32>
    %25 = arith.addf %23, %24 : vector<8x32xf32>
    %26 = arith.truncf %25 : vector<8x32xf32> to vector<8x32xbf16>
    %c0_13 = arith.constant 0 : index
    %c0_14 = arith.constant 0 : index
    %27 = vector.load %arg5[%c0_13, %c0_14] : memref<32x96xbf16, #tpu.memory_space<vmem>>, vector<32x96xbf16>
    %cst_15 = arith.constant dense<0.000000e+00> : vector<8x96xf32>
    %28 = tpu.matmul %26, %27, %cst_15 {dimension_numbers = #tpu.dot_dimension_numbers<[1], [0], [0], [1], [0, 0, 1, 1], [], []>} : vector<8x32xbf16>, vector<32x96xbf16>, vector<8x96xf32> -> vector<8x96xf32>
    %c0_16 = arith.constant 0 : index
    %c0_17 = arith.constant 0 : index
    %29 = vector.load %arg6[%c0_16, %c0_17] : memref<1x96xf32, #tpu.memory_space<vmem>>, vector<1x96xf32>
    %30 = vector.broadcast %29 : vector<1x96xf32> to vector<8x96xf32>
    %31 = arith.addf %28, %30 : vector<8x96xf32>
    %32 = vector.extract_strided_slice %31 {offsets = [0, 0], sizes = [8, 32], strides = [1, 1]} : vector<8x96xf32> to vector<8x32xf32>
    %cst_18 = arith.constant 0.353553385 : f32
    %33 = vector.broadcast %cst_18 : f32 to vector<8x32xf32>
    %34 = arith.mulf %32, %33 : vector<8x32xf32>
    %35 = vector.extract_strided_slice %34 {offsets = [0, 0], sizes = [8, 8], strides = [1, 1]} : vector<8x32xf32> to vector<8x8xf32>
    %36 = vector.extract_strided_slice %34 {offsets = [0, 8], sizes = [8, 8], strides = [1, 1]} : vector<8x32xf32> to vector<8x8xf32>
    %37 = vector.extract_strided_slice %34 {offsets = [0, 16], sizes = [8, 8], strides = [1, 1]} : vector<8x32xf32> to vector<8x8xf32>
    %38 = vector.extract_strided_slice %34 {offsets = [0, 24], sizes = [8, 8], strides = [1, 1]} : vector<8x32xf32> to vector<8x8xf32>
    %39 = vector.shape_cast %35 : vector<8x8xf32> to vector<1x8x8xf32>
    %40 = vector.shape_cast %36 : vector<8x8xf32> to vector<1x8x8xf32>
    %41 = vector.shape_cast %37 : vector<8x8xf32> to vector<1x8x8xf32>
    %42 = vector.shape_cast %38 : vector<8x8xf32> to vector<1x8x8xf32>
    %43 = tpu.concatenate %39, %40, %41, %42 in 0 : vector<1x8x8xf32>, vector<1x8x8xf32>, vector<1x8x8xf32>, vector<1x8x8xf32> -> vector<4x8x8xf32>
    %44 = arith.truncf %43 : vector<4x8x8xf32> to vector<4x8x8xbf16>
    %45 = vector.extract_strided_slice %31 {offsets = [0, 32], sizes = [8, 32], strides = [1, 1]} : vector<8x96xf32> to vector<8x32xf32>
    %46 = vector.extract_strided_slice %45 {offsets = [0, 0], sizes = [8, 8], strides = [1, 1]} : vector<8x32xf32> to vector<8x8xf32>
    %47 = vector.extract_strided_slice %45 {offsets = [0, 8], sizes = [8, 8], strides = [1, 1]} : vector<8x32xf32> to vector<8x8xf32>
    %48 = vector.extract_strided_slice %45 {offsets = [0, 16], sizes = [8, 8], strides = [1, 1]} : vector<8x32xf32> to vector<8x8xf32>
    %49 = vector.extract_strided_slice %45 {offsets = [0, 24], sizes = [8, 8], strides = [1, 1]} : vector<8x32xf32> to vector<8x8xf32>
    %50 = vector.shape_cast %46 : vector<8x8xf32> to vector<1x8x8xf32>
    %51 = vector.shape_cast %47 : vector<8x8xf32> to vector<1x8x8xf32>
    %52 = vector.shape_cast %48 : vector<8x8xf32> to vector<1x8x8xf32>
    %53 = vector.shape_cast %49 : vector<8x8xf32> to vector<1x8x8xf32>
    %54 = tpu.concatenate %50, %51, %52, %53 in 0 : vector<1x8x8xf32>, vector<1x8x8xf32>, vector<1x8x8xf32>, vector<1x8x8xf32> -> vector<4x8x8xf32>
    %55 = arith.truncf %54 : vector<4x8x8xf32> to vector<4x8x8xbf16>
    %56 = vector.extract_strided_slice %31 {offsets = [0, 64], sizes = [8, 32], strides = [1, 1]} : vector<8x96xf32> to vector<8x32xf32>
    %57 = vector.extract_strided_slice %56 {offsets = [0, 0], sizes = [8, 8], strides = [1, 1]} : vector<8x32xf32> to vector<8x8xf32>
    %58 = vector.extract_strided_slice %56 {offsets = [0, 8], sizes = [8, 8], strides = [1, 1]} : vector<8x32xf32> to vector<8x8xf32>
    %59 = vector.extract_strided_slice %56 {offsets = [0, 16], sizes = [8, 8], strides = [1, 1]} : vector<8x32xf32> to vector<8x8xf32>
    %60 = vector.extract_strided_slice %56 {offsets = [0, 24], sizes = [8, 8], strides = [1, 1]} : vector<8x32xf32> to vector<8x8xf32>
    %61 = vector.shape_cast %57 : vector<8x8xf32> to vector<1x8x8xf32>
    %62 = vector.shape_cast %58 : vector<8x8xf32> to vector<1x8x8xf32>
    %63 = vector.shape_cast %59 : vector<8x8xf32> to vector<1x8x8xf32>
    %64 = vector.shape_cast %60 : vector<8x8xf32> to vector<1x8x8xf32>
    %65 = tpu.concatenate %61, %62, %63, %64 in 0 : vector<1x8x8xf32>, vector<1x8x8xf32>, vector<1x8x8xf32>, vector<1x8x8xf32> -> vector<4x8x8xf32>
    %66 = arith.truncf %65 : vector<4x8x8xf32> to vector<4x8x8xbf16>
    "tpu.trace_start"() <{level = 10 : i32, message = "hld,hmd->hlm"}> : () -> ()
    %cst_19 = arith.constant dense<0.000000e+00> : vector<4x8x8xf32>
    %67 = tpu.matmul %44, %55, %cst_19 {dimension_numbers = #tpu.dot_dimension_numbers<[2], [2], [1], [1], [0, 0, 0, 1, 1, 1], [0], [0]>} : vector<4x8x8xbf16>, vector<4x8x8xbf16>, vector<4x8x8xf32> -> vector<4x8x8xf32>
    "tpu.trace_stop"() : () -> ()
    %68 = vector.shape_cast %3 : vector<8x8xf32> to vector<1x8x8xf32>
    %69 = vector.broadcast %68 : vector<1x8x8xf32> to vector<4x8x8xf32>
    %70 = arith.addf %67, %69 : vector<4x8x8xf32>
    %cst_20 = arith.constant dense<0xFF800000> : vector<4x8xf32>
    %71 = vector.multi_reduction <maximumf>, %70, %cst_20 [2] : vector<4x8x8xf32> to vector<4x8xf32>
    %72 = vector.shape_cast %71 : vector<4x8xf32> to vector<4x8x1xf32>
    %73 = vector.broadcast %72 : vector<4x8x1xf32> to vector<4x8x8xf32>
    %74 = arith.subf %70, %73 : vector<4x8x8xf32>
    %75 = math.exp %74 : vector<4x8x8xf32>
    %cst_21 = arith.constant dense<0.000000e+00> : vector<4x8xf32>
    %76 = vector.multi_reduction <add>, %75, %cst_21 [2] : vector<4x8x8xf32> to vector<4x8xf32>
    %77 = vector.shape_cast %76 : vector<4x8xf32> to vector<4x8x1xf32>
    %78 = tpu.reciprocal %77 {approx = true} : vector<4x8x1xf32> -> vector<4x8x1xf32>
    %79 = vector.broadcast %78 : vector<4x8x1xf32> to vector<4x8x8xf32>
    %80 = arith.mulf %75, %79 : vector<4x8x8xf32>
    %81 = arith.truncf %80 : vector<4x8x8xf32> to vector<4x8x8xbf16>
    "tpu.trace_start"() <{level = 10 : i32, message = "hlm,hmd->hld"}> : () -> ()
    %cst_22 = arith.constant dense<0.000000e+00> : vector<4x8x8xf32>
    %82 = tpu.matmul %81, %66, %cst_22 {dimension_numbers = #tpu.dot_dimension_numbers<[2], [1], [1], [2], [0, 0, 0, 1, 1, 2], [0], [0]>} : vector<4x8x8xbf16>, vector<4x8x8xbf16>, vector<4x8x8xf32> -> vector<4x8x8xf32>
    "tpu.trace_stop"() : () -> ()
    %83 = vector.extract_strided_slice %82 {offsets = [0, 0, 0], sizes = [1, 8, 8], strides = [1, 1, 1]} : vector<4x8x8xf32> to vector<1x8x8xf32>
    %84 = vector.shape_cast %83 : vector<1x8x8xf32> to vector<8x8xf32>
    %85 = vector.extract_strided_slice %82 {offsets = [1, 0, 0], sizes = [1, 8, 8], strides = [1, 1, 1]} : vector<4x8x8xf32> to vector<1x8x8xf32>
    %86 = vector.shape_cast %85 : vector<1x8x8xf32> to vector<8x8xf32>
    %87 = vector.extract_strided_slice %82 {offsets = [2, 0, 0], sizes = [1, 8, 8], strides = [1, 1, 1]} : vector<4x8x8xf32> to vector<1x8x8xf32>
    %88 = vector.shape_cast %87 : vector<1x8x8xf32> to vector<8x8xf32>
    %89 = vector.extract_strided_slice %82 {offsets = [3, 0, 0], sizes = [1, 8, 8], strides = [1, 1, 1]} : vector<4x8x8xf32> to vector<1x8x8xf32>
    %90 = vector.shape_cast %89 : vector<1x8x8xf32> to vector<8x8xf32>
    %91 = tpu.concatenate %84, %86, %88, %90 in 1 : vector<8x8xf32>, vector<8x8xf32>, vector<8x8xf32>, vector<8x8xf32> -> vector<8x32xf32>
    %92 = arith.truncf %91 : vector<8x32xf32> to vector<8x32xbf16>
    %c0_23 = arith.constant 0 : index
    %c0_24 = arith.constant 0 : index
    %93 = vector.load %arg7[%c0_23, %c0_24] : memref<32x32xbf16, #tpu.memory_space<vmem>>, vector<32x32xbf16>
    %cst_25 = arith.constant dense<0.000000e+00> : vector<8x32xf32>
    %94 = tpu.matmul %92, %93, %cst_25 {dimension_numbers = #tpu.dot_dimension_numbers<[1], [0], [0], [1], [0, 0, 1, 1], [], []>} : vector<8x32xbf16>, vector<32x32xbf16>, vector<8x32xf32> -> vector<8x32xf32>
    %c0_26 = arith.constant 0 : index
    %c0_27 = arith.constant 0 : index
    %95 = vector.load %arg8[%c0_26, %c0_27] : memref<1x32xf32, #tpu.memory_space<vmem>>, vector<1x32xf32>
    %96 = vector.broadcast %95 : vector<1x32xf32> to vector<8x32xf32>
    %97 = arith.addf %94, %96 : vector<8x32xf32>
    %98 = arith.addf %1, %97 : vector<8x32xf32>
    %c0_28 = arith.constant 0 : index
    %c0_29 = arith.constant 0 : index
    %99 = vector.load %arg9[%c0_28, %c0_29] : memref<1x32xf32, #tpu.memory_space<vmem>>, vector<1x32xf32>
    %c0_30 = arith.constant 0 : index
    %c0_31 = arith.constant 0 : index
    %100 = vector.load %arg10[%c0_30, %c0_31] : memref<1x32xf32, #tpu.memory_space<vmem>>, vector<1x32xf32>
    %cst_32 = arith.constant dense<0.000000e+00> : vector<8xf32>
    %101 = vector.multi_reduction <add>, %98, %cst_32 [1] : vector<8x32xf32> to vector<8xf32>
    %102 = vector.shape_cast %101 : vector<8xf32> to vector<8x1xf32>
    %cst_33 = arith.constant 3.200000e+01 : f32
    %103 = vector.broadcast %cst_33 : f32 to vector<8x1xf32>
    %104 = arith.divf %102, %103 : vector<8x1xf32>
    %105 = vector.broadcast %104 : vector<8x1xf32> to vector<8x32xf32>
    %106 = arith.subf %98, %105 : vector<8x32xf32>
    %107 = arith.mulf %106, %106 : vector<8x32xf32>
    %cst_34 = arith.constant dense<0.000000e+00> : vector<8xf32>
    %108 = vector.multi_reduction <add>, %107, %cst_34 [1] : vector<8x32xf32> to vector<8xf32>
    %109 = vector.shape_cast %108 : vector<8xf32> to vector<8x1xf32>
    %cst_35 = arith.constant 3.200000e+01 : f32
    %110 = vector.broadcast %cst_35 : f32 to vector<8x1xf32>
    %111 = arith.divf %109, %110 : vector<8x1xf32>
    %cst_36 = arith.constant 9.99999996E-13 : f32
    %112 = vector.broadcast %cst_36 : f32 to vector<8x1xf32>
    %113 = arith.addf %111, %112 : vector<8x1xf32>
    %114 = math.rsqrt %113 : vector<8x1xf32>
    %115 = vector.broadcast %114 : vector<8x1xf32> to vector<8x32xf32>
    %116 = arith.mulf %106, %115 : vector<8x32xf32>
    %117 = vector.broadcast %99 : vector<1x32xf32> to vector<8x32xf32>
    %118 = arith.mulf %117, %116 : vector<8x32xf32>
    %119 = vector.broadcast %100 : vector<1x32xf32> to vector<8x32xf32>
    %120 = arith.addf %118, %119 : vector<8x32xf32>
    %121 = arith.truncf %120 : vector<8x32xf32> to vector<8x32xbf16>
    %c0_37 = arith.constant 0 : index
    %c0_38 = arith.constant 0 : index
    %122 = vector.load %arg11[%c0_37, %c0_38] : memref<32x128xbf16, #tpu.memory_space<vmem>>, vector<32x128xbf16>
    %cst_39 = arith.constant dense<0.000000e+00> : vector<8x128xf32>
    %123 = tpu.matmul %121, %122, %cst_39 {dimension_numbers = #tpu.dot_dimension_numbers<[1], [0], [0], [1], [0, 0, 1, 1], [], []>} : vector<8x32xbf16>, vector<32x128xbf16>, vector<8x128xf32> -> vector<8x128xf32>
    %c0_40 = arith.constant 0 : index
    %c0_41 = arith.constant 0 : index
    %124 = vector.load %arg12[%c0_40, %c0_41] : memref<1x128xf32, #tpu.memory_space<vmem>>, vector<1x128xf32>
    %125 = vector.broadcast %124 : vector<1x128xf32> to vector<8x128xf32>
    %126 = arith.addf %123, %125 : vector<8x128xf32>
    %cst_42 = arith.constant 1.702000e+00 : f32
    %127 = vector.broadcast %cst_42 : f32 to vector<8x128xf32>
    %128 = arith.mulf %127, %126 : vector<8x128xf32>
    %129 = arith.negf %128 : vector<8x128xf32>
    %130 = math.exp %129 : vector<8x128xf32>
    %cst_43 = arith.constant 1.000000e+00 : f32
    %131 = vector.broadcast %cst_43 : f32 to vector<8x128xf32>
    %132 = arith.addf %131, %130 : vector<8x128xf32>
    %133 = arith.divf %131, %132 : vector<8x128xf32>
    %134 = arith.mulf %126, %133 : vector<8x128xf32>
    %135 = arith.truncf %134 : vector<8x128xf32> to vector<8x128xbf16>
    %c0_44 = arith.constant 0 : index
    %c0_45 = arith.constant 0 : index
    %136 = vector.load %arg13[%c0_44, %c0_45] : memref<128x32xbf16, #tpu.memory_space<vmem>>, vector<128x32xbf16>
    %cst_46 = arith.constant dense<0.000000e+00> : vector<8x32xf32>
    %137 = tpu.matmul %135, %136, %cst_46 {dimension_numbers = #tpu.dot_dimension_numbers<[1], [0], [0], [1], [0, 0, 1, 1], [], []>} : vector<8x128xbf16>, vector<128x32xbf16>, vector<8x32xf32> -> vector<8x32xf32>
    %c0_47 = arith.constant 0 : index
    %c0_48 = arith.constant 0 : index
    %138 = vector.load %arg14[%c0_47, %c0_48] : memref<1x32xf32, #tpu.memory_space<vmem>>, vector<1x32xf32>
    %139 = vector.broadcast %138 : vector<1x32xf32> to vector<8x32xf32>
    %140 = arith.addf %137, %139 : vector<8x32xf32>
    %141 = arith.addf %98, %140 : vector<8x32xf32>
    %c0_49 = arith.constant 0 : index
    %c0_50 = arith.constant 0 : index
    %c0_51 = arith.constant 0 : index
    %142 = vector.load %arg15[%c0_49, %c0_50, %c0_51] : memref<1x8x32xf32, #tpu.memory_space<vmem>>, vector<1x8x32xf32>
    %143 = vector.shape_cast %142 : vector<1x8x32xf32> to vector<8x32xf32>
    %144 = vector.shape_cast %141 : vector<8x32xf32> to vector<1x8x32xf32>
    tpu.vector_store %arg15[%c0_49, %c0_50, %c0_51], %144 {strides = array<i32>} : memref<1x8x32xf32, #tpu.memory_space<vmem>>, vector<1x8x32xf32>,
    return
  }
  func.func @transform_0(%arg0: i32) -> (i32, i32, i32) {
    %c0_i32 = arith.constant 0 : i32
    %c0_i32_0 = arith.constant 0 : i32
    %c0_i32_1 = arith.constant 0 : i32
    return %arg0, %c0_i32, %c0_i32_0 : i32, i32, i32
  }
  func.func @transform_1(%arg0: i32) -> (i32, i32, i32) {
    %c0_i32 = arith.constant 0 : i32
    %c0_i32_0 = arith.constant 0 : i32
    %c0_i32_1 = arith.constant 0 : i32
    return %arg0, %c0_i32, %c0_i32_0 : i32, i32, i32
  }
  func.func @transform_2(%arg0: i32) -> (i32, i32) {
    %c0_i32 = arith.constant 0 : i32
    %c0_i32_0 = arith.constant 0 : i32
    %c0_i32_1 = arith.constant 0 : i32
    return %c0_i32, %c0_i32_0 : i32, i32
  }
  func.func @transform_3(%arg0: i32) -> (i32, i32) {
    %c0_i32 = arith.constant 0 : i32
    %c0_i32_0 = arith.constant 0 : i32
    %c0_i32_1 = arith.constant 0 : i32
    return %c0_i32, %c0_i32_0 : i32, i32
  }
  func.func @transform_4(%arg0: i32) -> (i32, i32) {
    %c0_i32 = arith.constant 0 : i32
    %c0_i32_0 = arith.constant 0 : i32
    %c0_i32_1 = arith.constant 0 : i32
    return %c0_i32, %c0_i32_0 : i32, i32
  }
  func.func @transform_5(%arg0: i32) -> (i32, i32) {
    %c0_i32 = arith.constant 0 : i32
    %c0_i32_0 = arith.constant 0 : i32
    %c0_i32_1 = arith.constant 0 : i32
    return %c0_i32, %c0_i32_0 : i32, i32
  }
  func.func @transform_6(%arg0: i32) -> (i32, i32) {
    %c0_i32 = arith.constant 0 : i32
    %c0_i32_0 = arith.constant 0 : i32
    %c0_i32_1 = arith.constant 0 : i32
    return %c0_i32, %c0_i32_0 : i32, i32
  }
  func.func @transform_7(%arg0: i32) -> (i32, i32) {
    %c0_i32 = arith.constant 0 : i32
    %c0_i32_0 = arith.constant 0 : i32
    %c0_i32_1 = arith.constant 0 : i32
    return %c0_i32, %c0_i32_0 : i32, i32
  }
  func.func @transform_8(%arg0: i32) -> (i32, i32) {
    %c0_i32 = arith.constant 0 : i32
    %c0_i32_0 = arith.constant 0 : i32
    %c0_i32_1 = arith.constant 0 : i32
    return %c0_i32, %c0_i32_0 : i32, i32
  }
  func.func @transform_9(%arg0: i32) -> (i32, i32) {
    %c0_i32 = arith.constant 0 : i32
    %c0_i32_0 = arith.constant 0 : i32
    %c0_i32_1 = arith.constant 0 : i32
    return %c0_i32, %c0_i32_0 : i32, i32
  }
  func.func @transform_10(%arg0: i32) -> (i32, i32) {
    %c0_i32 = arith.constant 0 : i32
    %c0_i32_0 = arith.constant 0 : i32
    %c0_i32_1 = arith.constant 0 : i32
    return %c0_i32, %c0_i32_0 : i32, i32
  }
  func.func @transform_11(%arg0: i32) -> (i32, i32) {
    %c0_i32 = arith.constant 0 : i32
    %c0_i32_0 = arith.constant 0 : i32
    %c0_i32_1 = arith.constant 0 : i32
    return %c0_i32, %c0_i32_0 : i32, i32
  }
  func.func @transform_12(%arg0: i32) -> (i32, i32) {
    %c0_i32 = arith.constant 0 : i32
    %c0_i32_0 = arith.constant 0 : i32
    %c0_i32_1 = arith.constant 0 : i32
    return %c0_i32, %c0_i32_0 : i32, i32
  }
  func.func @transform_13(%arg0: i32) -> (i32, i32) {
    %c0_i32 = arith.constant 0 : i32
    %c0_i32_0 = arith.constant 0 : i32
    %c0_i32_1 = arith.constant 0 : i32
    return %c0_i32, %c0_i32_0 : i32, i32
  }
  func.func @transform_14(%arg0: i32) -> (i32, i32, i32) {
    %c0_i32 = arith.constant 0 : i32
    %c0_i32_0 = arith.constant 0 : i32
    %c0_i32_1 = arith.constant 0 : i32
    return %arg0, %c0_i32, %c0_i32_0 : i32, i32, i32
  }
}

</mosaic_0001>

<llo_original>
// kernel: transformer_clip_forward.2
$region0: #{transformer_clip_forward.2}
  #allocation0 [shape = 'u32[]', space=smem, size = 0x4, offset = 0x4, fixed_abs, tag = 'smem constant byte address 0x4 - core index']
  #allocation1 [shape = 'u32[144,128]{1,0:T(1,128)}', space=vmem, size = 0x12000, scoped, tag = 'internal scratch']
  %s0 = inlined_call_operand.vmem [shape: f32[2,8,32], index: 0, kind: input, shape index: {}]
  %s1 = inlined_call_operand.vmem [shape: f32[2,8,8], index: 1, kind: input, shape index: {}]
  %s2 = inlined_call_operand.vmem [shape: f32[1,32], index: 2, kind: input, shape index: {}]
  %s3 = inlined_call_operand.vmem [shape: f32[1,32], index: 3, kind: input, shape index: {}]
  %s4 = inlined_call_operand.vmem [shape: bf16[32,96], index: 4, kind: input, shape index: {}]
  %s5 = inlined_call_operand.vmem [shape: f32[1,96], index: 5, kind: input, shape index: {}]
  %s6 = inlined_call_operand.vmem [shape: bf16[32,32], index: 6, kind: input, shape index: {}]
  %s7 = inlined_call_operand.vmem [shape: f32[1,32], index: 7, kind: input, shape index: {}]
  %s8 = inlined_call_operand.vmem [shape: f32[1,32], index: 8, kind: input, shape index: {}]
  %s9 = inlined_call_operand.vmem [shape: f32[1,32], index: 9, kind: input, shape index: {}]
  %s10 = inlined_call_operand.vmem [shape: bf16[32,128], index: 10, kind: input, shape index: {}]
  %s11 = inlined_call_operand.vmem [shape: f32[1,128], index: 11, kind: input, shape index: {}]
  %s12 = inlined_call_operand.vmem [shape: bf16[128,32], index: 12, kind: input, shape index: {}]
  %s13 = inlined_call_operand.vmem [shape: f32[1,32], index: 13, kind: input, shape index: {}]
  %s14 = inlined_call_operand.vmem [shape: f32[2,8,32], index: 14, kind: output, shape index: {}]
  %s15 = sld [smem:[#allocation0]]
  $region89: #{transformer_clip_forward.2} parent=0
    _
  %s17 = ssub.s32 1, %s15
  %s18 = scalar_select 0, %s17, %s15
  loop: start=0, step=1, limit=4
  $region2: #{transformer_clip_forward.2} parent=0 // loop_pre_header
    _
  $region3: #{transformer_clip_forward.2} parent=0 // loop_header
    %s20 = sphi 0, %s24
    %p21 = scmp.ge.s32.totalorder %s20, 4
    %s30 = sphi 0, %s32
    %s33 = sphi 0, %s30
    %s34 = sphi 0, %s33
    %s50 = sphi 0, %s34
    %s56 = sphi 0, %s58
    %s59 = sphi 0, %s56
    %s60 = sphi 0, %s59
    %s76 = sphi 0, %s60
    %s80 = sphi 0, %s80
    %s82 = sphi 0, %s80
    %s83 = sphi 0, %s82
    %s97 = sphi 0, %s83
    %s101 = sphi 0, %s101
    %s103 = sphi 0, %s101
    %s104 = sphi 0, %s103
    %s118 = sphi 0, %s104
    %s122 = sphi 0, %s122
    %s124 = sphi 0, %s122
    %s125 = sphi 0, %s124
    %s139 = sphi 0, %s125
    %s143 = sphi 0, %s143
    %s145 = sphi 0, %s143
    %s146 = sphi 0, %s145
    %s160 = sphi 0, %s146
    %s164 = sphi 0, %s164
    %s166 = sphi 0, %s164
    %s167 = sphi 0, %s166
    %s181 = sphi 0, %s167
    %s185 = sphi 0, %s185
    %s187 = sphi 0, %s185
    %s188 = sphi 0, %s187
    %s202 = sphi 0, %s188
    %s206 = sphi 0, %s206
    %s208 = sphi 0, %s206
    %s209 = sphi 0, %s208
    %s223 = sphi 0, %s209
    %s227 = sphi 0, %s227
    %s229 = sphi 0, %s227
    %s230 = sphi 0, %s229
    %s244 = sphi 0, %s230
    %s248 = sphi 0, %s248
    %s250 = sphi 0, %s248
    %s251 = sphi 0, %s250
    %s265 = sphi 0, %s251
    %s269 = sphi 0, %s269
    %s271 = sphi 0, %s269
    %s272 = sphi 0, %s271
    %s286 = sphi 0, %s272
    %s290 = sphi 0, %s290
    %s292 = sphi 0, %s290
    %s293 = sphi 0, %s292
    %s307 = sphi 0, %s293
    %s311 = sphi 0, %s311
    %s313 = sphi 0, %s311
    %s314 = sphi 0, %s313
    %s328 = sphi 0, %s314
    %s334 = sphi 0, %s336
    %s337 = sphi 0, %s334
    %s338 = sphi 0, %s337
    %s354 = sphi 0, %s338
  $region4: #{transformer_clip_forward.2} parent=0 // loop_header_branch
    %23 = sbr.rel (%p21) target = $region8
  $region5: #{transformer_clip_forward.2} parent=0 // loop_body
    %s25 = ssub.s32 %s20, 1
    %s26 = ssub.s32 %s20, 2
    %s27 = sadd.s32 %s20, 1
    %s28 = ssub.s32 %s20, %s27
    %p29 = scmp.eq.s32.totalorder %s28, 0
    %s31 = sadd.s32 %s30, 1
    %s32 = scalar_select %p29, %s30, %s31
    %p35 = pneg %p29
    %p36 = scmp.eq.s32.totalorder %s20, 1
    %p37 = por %p35, %p36
    %p38 = scmp.ne.s32.totalorder %s30, %s33
    %p39 = scmp.eq.s32.totalorder %s20, 0
    %p40 = por %p38, %p39
    %p41 = scmp.ne.s32.totalorder %s30, %s33
    %p42 = scmp.eq.s32.totalorder %s25, 1
    %p43 = por %p41, %p42
    %p44 = scmp.ne.s32.totalorder %s33, %s34
    %p45 = scmp.eq.s32.totalorder %s25, 0
    %p46 = por %p44, %p45
    %p47 = scmp.ne.s32.totalorder %s33, %s34
    %p48 = scmp.eq.s32.totalorder %s26, 1
    %p49 = por %p47, %p48
    %p51 = scmp.ne.s32.totalorder %s34, %s50
    %p52 = scmp.eq.s32.totalorder %s26, 0
    %p53 = por %p51, %p52
    %s54 = ssub.s32 %s20, %s27
    %p55 = scmp.eq.s32.totalorder %s54, 0
    %s57 = sadd.s32 %s56, 1
    %s58 = scalar_select %p55, %s56, %s57
    %p61 = pneg %p55
    %p62 = scmp.eq.s32.totalorder %s20, 1
    %p63 = por %p61, %p62
    %p64 = scmp.ne.s32.totalorder %s56, %s59
    %p65 = scmp.eq.s32.totalorder %s20, 0
    %p66 = por %p64, %p65
    %p67 = scmp.ne.s32.totalorder %s56, %s59
    %p68 = scmp.eq.s32.totalorder %s25, 1
    %p69 = por %p67, %p68
    %p70 = scmp.ne.s32.totalorder %s59, %s60
    %p71 = scmp.eq.s32.totalorder %s25, 0
    %p72 = por %p70, %p71
    %p73 = scmp.ne.s32.totalorder %s59, %s60
    %p74 = scmp.eq.s32.totalorder %s26, 1
    %p75 = por %p73, %p74
    %p77 = scmp.ne.s32.totalorder %s60, %s76
    %p78 = scmp.eq.s32.totalorder %s26, 0
    %p79 = por %p77, %p78
    %s81 = sadd.s32 %s80, 1
    %p84 = scmp.eq.s32.totalorder %s20, 1
    %p85 = scmp.ne.s32.totalorder %s80, %s82
    %p86 = scmp.eq.s32.totalorder %s20, 0
    %p87 = por %p85, %p86
    %p88 = scmp.ne.s32.totalorder %s80, %s82
    %p89 = scmp.eq.s32.totalorder %s25, 1
    %p90 = por %p88, %p89
    %p91 = scmp.ne.s32.totalorder %s82, %s83
    %p92 = scmp.eq.s32.totalorder %s25, 0
    %p93 = por %p91, %p92
    %p94 = scmp.ne.s32.totalorder %s82, %s83
    %p95 = scmp.eq.s32.totalorder %s26, 1
    %p96 = por %p94, %p95
    %p98 = scmp.ne.s32.totalorder %s83, %s97
    %p99 = scmp.eq.s32.totalorder %s26, 0
    %p100 = por %p98, %p99
    %s102 = sadd.s32 %s101, 1
    %p105 = scmp.eq.s32.totalorder %s20, 1
    %p106 = scmp.ne.s32.totalorder %s101, %s103
    %p107 = scmp.eq.s32.totalorder %s20, 0
    %p108 = por %p106, %p107
    %p109 = scmp.ne.s32.totalorder %s101, %s103
    %p110 = scmp.eq.s32.totalorder %s25, 1
    %p111 = por %p109, %p110
    %p112 = scmp.ne.s32.totalorder %s103, %s104
    %p113 = scmp.eq.s32.totalorder %s25, 0
    %p114 = por %p112, %p113
    %p115 = scmp.ne.s32.totalorder %s103, %s104
    %p116 = scmp.eq.s32.totalorder %s26, 1
    %p117 = por %p115, %p116
    %p119 = scmp.ne.s32.totalorder %s104, %s118
    %p120 = scmp.eq.s32.totalorder %s26, 0
    %p121 = por %p119, %p120
    %s123 = sadd.s32 %s122, 1
    %p126 = scmp.eq.s32.totalorder %s20, 1
    %p127 = scmp.ne.s32.totalorder %s122, %s124
    %p128 = scmp.eq.s32.totalorder %s20, 0
    %p129 = por %p127, %p128
    %p130 = scmp.ne.s32.totalorder %s122, %s124
    %p131 = scmp.eq.s32.totalorder %s25, 1
    %p132 = por %p130, %p131
    %p133 = scmp.ne.s32.totalorder %s124, %s125
    %p134 = scmp.eq.s32.totalorder %s25, 0
    %p135 = por %p133, %p134
    %p136 = scmp.ne.s32.totalorder %s124, %s125
    %p137 = scmp.eq.s32.totalorder %s26, 1
    %p138 = por %p136, %p137
    %p140 = scmp.ne.s32.totalorder %s125, %s139
    %p141 = scmp.eq.s32.totalorder %s26, 0
    %p142 = por %p140, %p141
    %s144 = sadd.s32 %s143, 1
    %p147 = scmp.eq.s32.totalorder %s20, 1
    %p148 = scmp.ne.s32.totalorder %s143, %s145
    %p149 = scmp.eq.s32.totalorder %s20, 0
    %p150 = por %p148, %p149
    %p151 = scmp.ne.s32.totalorder %s143, %s145
    %p152 = scmp.eq.s32.totalorder %s25, 1
    %p153 = por %p151, %p152
    %p154 = scmp.ne.s32.totalorder %s145, %s146
    %p155 = scmp.eq.s32.totalorder %s25, 0
    %p156 = por %p154, %p155
    %p157 = scmp.ne.s32.totalorder %s145, %s146
    %p158 = scmp.eq.s32.totalorder %s26, 1
    %p159 = por %p157, %p158
    %p161 = scmp.ne.s32.totalorder %s146, %s160
    %p162 = scmp.eq.s32.totalorder %s26, 0
    %p163 = por %p161, %p162
    %s165 = sadd.s32 %s164, 1
    %p168 = scmp.eq.s32.totalorder %s20, 1
    %p169 = scmp.ne.s32.totalorder %s164, %s166
    %p170 = scmp.eq.s32.totalorder %s20, 0
    %p171 = por %p169, %p170
    %p172 = scmp.ne.s32.totalorder %s164, %s166
    %p173 = scmp.eq.s32.totalorder %s25, 1
    %p174 = por %p172, %p173
    %p175 = scmp.ne.s32.totalorder %s166, %s167
    %p176 = scmp.eq.s32.totalorder %s25, 0
    %p177 = por %p175, %p176
    %p178 = scmp.ne.s32.totalorder %s166, %s167
    %p179 = scmp.eq.s32.totalorder %s26, 1
    %p180 = por %p178, %p179
    %p182 = scmp.ne.s32.totalorder %s167, %s181
    %p183 = scmp.eq.s32.totalorder %s26, 0
    %p184 = por %p182, %p183
    %s186 = sadd.s32 %s185, 1
    %p189 = scmp.eq.s32.totalorder %s20, 1
    %p190 = scmp.ne.s32.totalorder %s185, %s187
    %p191 = scmp.eq.s32.totalorder %s20, 0
    %p192 = por %p190, %p191
    %p193 = scmp.ne.s32.totalorder %s185, %s187
    %p194 = scmp.eq.s32.totalorder %s25, 1
    %p195 = por %p193, %p194
    %p196 = scmp.ne.s32.totalorder %s187, %s188
    %p197 = scmp.eq.s32.totalorder %s25, 0
    %p198 = por %p196, %p197
    %p199 = scmp.ne.s32.totalorder %s187, %s188
    %p200 = scmp.eq.s32.totalorder %s26, 1
    %p201 = por %p199, %p200
    %p203 = scmp.ne.s32.totalorder %s188, %s202
    %p204 = scmp.eq.s32.totalorder %s26, 0
    %p205 = por %p203, %p204
    %s207 = sadd.s32 %s206, 1
    %p210 = scmp.eq.s32.totalorder %s20, 1
    %p211 = scmp.ne.s32.totalorder %s206, %s208
    %p212 = scmp.eq.s32.totalorder %s20, 0
    %p213 = por %p211, %p212
    %p214 = scmp.ne.s32.totalorder %s206, %s208
    %p215 = scmp.eq.s32.totalorder %s25, 1
    %p216 = por %p214, %p215
    %p217 = scmp.ne.s32.totalorder %s208, %s209
    %p218 = scmp.eq.s32.totalorder %s25, 0
    %p219 = por %p217, %p218
    %p220 = scmp.ne.s32.totalorder %s208, %s209
    %p221 = scmp.eq.s32.totalorder %s26, 1
    %p222 = por %p220, %p221
    %p224 = scmp.ne.s32.totalorder %s209, %s223
    %p225 = scmp.eq.s32.totalorder %s26, 0
    %p226 = por %p224, %p225
    %s228 = sadd.s32 %s227, 1
    %p231 = scmp.eq.s32.totalorder %s20, 1
    %p232 = scmp.ne.s32.totalorder %s227, %s229
    %p233 = scmp.eq.s32.totalorder %s20, 0
    %p234 = por %p232, %p233
    %p235 = scmp.ne.s32.totalorder %s227, %s229
    %p236 = scmp.eq.s32.totalorder %s25, 1
    %p237 = por %p235, %p236
    %p238 = scmp.ne.s32.totalorder %s229, %s230
    %p239 = scmp.eq.s32.totalorder %s25, 0
    %p240 = por %p238, %p239
    %p241 = scmp.ne.s32.totalorder %s229, %s230
    %p242 = scmp.eq.s32.totalorder %s26, 1
    %p243 = por %p241, %p242
    %p245 = scmp.ne.s32.totalorder %s230, %s244
    %p246 = scmp.eq.s32.totalorder %s26, 0
    %p247 = por %p245, %p246
    %s249 = sadd.s32 %s248, 1
    %p252 = scmp.eq.s32.totalorder %s20, 1
    %p253 = scmp.ne.s32.totalorder %s248, %s250
    %p254 = scmp.eq.s32.totalorder %s20, 0
    %p255 = por %p253, %p254
    %p256 = scmp.ne.s32.totalorder %s248, %s250
    %p257 = scmp.eq.s32.totalorder %s25, 1
    %p258 = por %p256, %p257
    %p259 = scmp.ne.s32.totalorder %s250, %s251
    %p260 = scmp.eq.s32.totalorder %s25, 0
    %p261 = por %p259, %p260
    %p262 = scmp.ne.s32.totalorder %s250, %s251
    %p263 = scmp.eq.s32.totalorder %s26, 1
    %p264 = por %p262, %p263
    %p266 = scmp.ne.s32.totalorder %s251, %s265
    %p267 = scmp.eq.s32.totalorder %s26, 0
    %p268 = por %p266, %p267
    %s270 = sadd.s32 %s269, 1
    %p273 = scmp.eq.s32.totalorder %s20, 1
    %p274 = scmp.ne.s32.totalorder %s269, %s271
    %p275 = scmp.eq.s32.totalorder %s20, 0
    %p276 = por %p274, %p275
    %p277 = scmp.ne.s32.totalorder %s269, %s271
    %p278 = scmp.eq.s32.totalorder %s25, 1
    %p279 = por %p277, %p278
    %p280 = scmp.ne.s32.totalorder %s271, %s272
    %p281 = scmp.eq.s32.totalorder %s25, 0
    %p282 = por %p280, %p281
    %p283 = scmp.ne.s32.totalorder %s271, %s272
    %p284 = scmp.eq.s32.totalorder %s26, 1
    %p285 = por %p283, %p284
    %p287 = scmp.ne.s32.totalorder %s272, %s286
    %p288 = scmp.eq.s32.totalorder %s26, 0
    %p289 = por %p287, %p288
    %s291 = sadd.s32 %s290, 1
    %p294 = scmp.eq.s32.totalorder %s20, 1
    %p295 = scmp.ne.s32.totalorder %s290, %s292
    %p296 = scmp.eq.s32.totalorder %s20, 0
    %p297 = por %p295, %p296
    %p298 = scmp.ne.s32.totalorder %s290, %s292
    %p299 = scmp.eq.s32.totalorder %s25, 1
    %p300 = por %p298, %p299
    %p301 = scmp.ne.s32.totalorder %s292, %s293
    %p302 = scmp.eq.s32.totalorder %s25, 0
    %p303 = por %p301, %p302
    %p304 = scmp.ne.s32.totalorder %s292, %s293
    %p305 = scmp.eq.s32.totalorder %s26, 1
    %p306 = por %p304, %p305
    %p308 = scmp.ne.s32.totalorder %s293, %s307
    %p309 = scmp.eq.s32.totalorder %s26, 0
    %p310 = por %p308, %p309
    %s312 = sadd.s32 %s311, 1
    %p315 = scmp.eq.s32.totalorder %s20, 1
    %p316 = scmp.ne.s32.totalorder %s311, %s313
    %p317 = scmp.eq.s32.totalorder %s20, 0
    %p318 = por %p316, %p317
    %p319 = scmp.ne.s32.totalorder %s311, %s313
    %p320 = scmp.eq.s32.totalorder %s25, 1
    %p321 = por %p319, %p320
    %p322 = scmp.ne.s32.totalorder %s313, %s314
    %p323 = scmp.eq.s32.totalorder %s25, 0
    %p324 = por %p322, %p323
    %p325 = scmp.ne.s32.totalorder %s313, %s314
    %p326 = scmp.eq.s32.totalorder %s26, 1
    %p327 = por %p325, %p326
    %p329 = scmp.ne.s32.totalorder %s314, %s328
    %p330 = scmp.eq.s32.totalorder %s26, 0
    %p331 = por %p329, %p330
    %s332 = ssub.s32 %s20, %s27
    %p333 = scmp.eq.s32.totalorder %s332, 0
    %s335 = sadd.s32 %s334, 1
    %s336 = scalar_select %p333, %s334, %s335
    %p339 = pneg %p333
    %p340 = scmp.eq.s32.totalorder %s20, 1
    %p341 = por %p339, %p340
    %p342 = scmp.ne.s32.totalorder %s334, %s337
    %p343 = scmp.eq.s32.totalorder %s20, 0
    %p344 = por %p342, %p343
    %p345 = scmp.ne.s32.totalorder %s334, %s337
    %p346 = scmp.eq.s32.totalorder %s25, 1
    %p347 = por %p345, %p346
    %p348 = scmp.ne.s32.totalorder %s337, %s338
    %p349 = scmp.eq.s32.totalorder %s25, 0
    %p350 = por %p348, %p349
    %p351 = scmp.ne.s32.totalorder %s337, %s338
    %p352 = scmp.eq.s32.totalorder %s26, 1
    %p353 = por %p351, %p352
    %p355 = scmp.ne.s32.totalorder %s338, %s354
    %p356 = scmp.eq.s32.totalorder %s26, 0
    %p357 = por %p355, %p356
    %p358 = scmp.le.s32.totalorder 1, %s20
    %p359 = scmp.lt.s32.totalorder %s20, 3
    %p360 = pnand %p358, %p359
    %p361 = pneg %p360
    // Predicated region
    $region9: #{transformer_clip_forward.2} parent=5 // pred_check
      _
    $region10: #{transformer_clip_forward.2} parent=5 // pred_check_branch
      %363 = sbr.rel (%p360) target = $region12
    $region11: #{transformer_clip_forward.2} parent=5 // pred_region
      %s364 = ssub.s32 %s20, 1
      // Predicated region
      $region13: #{transformer_clip_forward.2} parent=11 // pred_check
        %p365 = pneg %p93
      $region14: #{transformer_clip_forward.2} parent=11 // pred_check_branch
        %367 = sbr.rel (%p365) target = $region16
      $region15: #{transformer_clip_forward.2} parent=11 // pred_region
        _
      $region16: #{transformer_clip_forward.2} parent=11 // pred_fallthru
        _
      // Predicated region
      $region17: #{transformer_clip_forward.2} parent=11 // pred_check
        %p368 = pneg %p114
      $region18: #{transformer_clip_forward.2} parent=11 // pred_check_branch
        %370 = sbr.rel (%p368) target = $region20
      $region19: #{transformer_clip_forward.2} parent=11 // pred_region
        _
      $region20: #{transformer_clip_forward.2} parent=11 // pred_fallthru
        _
      // Predicated region
      $region21: #{transformer_clip_forward.2} parent=11 // pred_check
        %p371 = pneg %p135
      $region22: #{transformer_clip_forward.2} parent=11 // pred_check_branch
        %373 = sbr.rel (%p371) target = $region24
      $region23: #{transformer_clip_forward.2} parent=11 // pred_region
        _
      $region24: #{transformer_clip_forward.2} parent=11 // pred_fallthru
        _
      // Predicated region
      $region25: #{transformer_clip_forward.2} parent=11 // pred_check
        %p374 = pneg %p156
      $region26: #{transformer_clip_forward.2} parent=11 // pred_check_branch
        %376 = sbr.rel (%p374) target = $region28
      $region27: #{transformer_clip_forward.2} parent=11 // pred_region
        _
      $region28: #{transformer_clip_forward.2} parent=11 // pred_fallthru
        _
      // Predicated region
      $region29: #{transformer_clip_forward.2} parent=11 // pred_check
        %p377 = pneg %p177
      $region30: #{transformer_clip_forward.2} parent=11 // pred_check_branch
        %379 = sbr.rel (%p377) target = $region32
      $region31: #{transformer_clip_forward.2} parent=11 // pred_region
        _
      $region32: #{transformer_clip_forward.2} parent=11 // pred_fallthru
        _
      // Predicated region
      $region33: #{transformer_clip_forward.2} parent=11 // pred_check
        %p380 = pneg %p198
      $region34: #{transformer_clip_forward.2} parent=11 // pred_check_branch
        %382 = sbr.rel (%p380) target = $region36
      $region35: #{transformer_clip_forward.2} parent=11 // pred_region
        _
      $region36: #{transformer_clip_forward.2} parent=11 // pred_fallthru
        _
      // Predicated region
      $region37: #{transformer_clip_forward.2} parent=11 // pred_check
        %p383 = pneg %p219
      $region38: #{transformer_clip_forward.2} parent=11 // pred_check_branch
        %385 = sbr.rel (%p383) target = $region40
      $region39: #{transformer_clip_forward.2} parent=11 // pred_region
        _
      $region40: #{transformer_clip_forward.2} parent=11 // pred_fallthru
        _
      // Predicated region
      $region41: #{transformer_clip_forward.2} parent=11 // pred_check
        %p386 = pneg %p240
      $region42: #{transformer_clip_forward.2} parent=11 // pred_check_branch
        %388 = sbr.rel (%p386) target = $region44
      $region43: #{transformer_clip_forward.2} parent=11 // pred_region
        _
      $region44: #{transformer_clip_forward.2} parent=11 // pred_fallthru
        _
      // Predicated region
      $region45: #{transformer_clip_forward.2} parent=11 // pred_check
        %p389 = pneg %p261
      $region46: #{transformer_clip_forward.2} parent=11 // pred_check_branch
        %391 = sbr.rel (%p389) target = $region48
      $region47: #{transformer_clip_forward.2} parent=11 // pred_region
        _
      $region48: #{transformer_clip_forward.2} parent=11 // pred_fallthru
        _
      // Predicated region
      $region49: #{transformer_clip_forward.2} parent=11 // pred_check
        %p392 = pneg %p282
      $region50: #{transformer_clip_forward.2} parent=11 // pred_check_branch
        %394 = sbr.rel (%p392) target = $region52
      $region51: #{transformer_clip_forward.2} parent=11 // pred_region
        _
      $region52: #{transformer_clip_forward.2} parent=11 // pred_fallthru
        _
      // Predicated region
      $region53: #{transformer_clip_forward.2} parent=11 // pred_check
        %p395 = pneg %p303
      $region54: #{transformer_clip_forward.2} parent=11 // pred_check_branch
        %397 = sbr.rel (%p395) target = $region56
      $region55: #{transformer_clip_forward.2} parent=11 // pred_region
        _
      $region56: #{transformer_clip_forward.2} parent=11 // pred_fallthru
        _
      // Predicated region
      $region57: #{transformer_clip_forward.2} parent=11 // pred_check
        %p398 = pneg %p324
      $region58: #{transformer_clip_forward.2} parent=11 // pred_check_branch
        %400 = sbr.rel (%p398) target = $region60
      $region59: #{transformer_clip_forward.2} parent=11 // pred_region
        _
      $region60: #{transformer_clip_forward.2} parent=11 // pred_fallthru
        _
    $region12: #{transformer_clip_forward.2} parent=5 // pred_fallthru
      _
    %p401 = scmp.lt.s32.totalorder %s20, 2
    // Predicated region
    $region61: #{transformer_clip_forward.2} parent=5 // pred_check
      %p402 = pneg %p401
    $region62: #{transformer_clip_forward.2} parent=5 // pred_check_branch
      %404 = sbr.rel (%p402) target = $region64
    $region63: #{transformer_clip_forward.2} parent=5 // pred_region
      // Predicated region
      $region65: #{transformer_clip_forward.2} parent=63 // pred_check
        %p405 = pneg %p40
      $region66: #{transformer_clip_forward.2} parent=63 // pred_check_branch
        %407 = sbr.rel (%p405) target = $region68
      $region67: #{transformer_clip_forward.2} parent=63 // pred_region
        %p408 = scmp.lt.s32.totalorder %s20, 1
        %s409 = scalar_select %p408, %s20, 1
        %s410 = smul.addr %s409, 8
        %s411 = scalar_lea.vmem %s0, %s410
      $region68: #{transformer_clip_forward.2} parent=63 // pred_fallthru
        _
      // Predicated region
      $region69: #{transformer_clip_forward.2} parent=63 // pred_check
        %p412 = pneg %p66
      $region70: #{transformer_clip_forward.2} parent=63 // pred_check_branch
        %414 = sbr.rel (%p412) target = $region72
      $region71: #{transformer_clip_forward.2} parent=63 // pred_region
        %p415 = scmp.lt.s32.totalorder %s20, 1
        %s416 = scalar_select %p415, %s20, 1
        %s417 = smul.addr %s416, 8
        %s418 = scalar_lea.vmem %s1, %s417
      $region72: #{transformer_clip_forward.2} parent=63 // pred_fallthru
        _
    $region64: #{transformer_clip_forward.2} parent=5 // pred_fallthru
      _
    %p419 = scmp.le.s32.totalorder 1, %s20
    %p420 = scmp.lt.s32.totalorder %s20, 3
    %p421 = pnand %p419, %p420
    %p422 = pneg %p421
    // Predicated region
    $region73: #{transformer_clip_forward.2} parent=5 // pred_check
      _
    $region74: #{transformer_clip_forward.2} parent=5 // pred_check_branch
      %424 = sbr.rel (%p421) target = $region76
    $region75: #{transformer_clip_forward.2} parent=5 // pred_region
      %s425 = ssub.s32 %s20, 1
      %p426 = scmp.lt.s32.totalorder %s25, 1
      %s427 = scalar_select %p426, %s25, 1
      %s428 = smul.addr %s427, 8
      %s429 = scalar_lea.vmem %s0, %s428
      %p430 = pneg %p46
      %p431 = pneg %p43
      %p432 = scmp.lt.s32.totalorder %s25, 1
      %s433 = scalar_select %p432, %s25, 1
      %s434 = smul.addr %s433, 8
      %s435 = scalar_lea.vmem %s1, %s434
      %p436 = pneg %p72
      %p437 = pneg %p69
      %p438 = pneg %p93
      %p439 = pneg %p90
      %p440 = pneg %p114
      %p441 = pneg %p111
      %p442 = pneg %p135
      %p443 = pneg %p132
      %p444 = pneg %p156
      %p445 = pneg %p153
      %p446 = pneg %p177
      %p447 = pneg %p174
      %p448 = pneg %p198
      %p449 = pneg %p195
      %p450 = pneg %p219
      %p451 = pneg %p216
      %p452 = pneg %p240
      %p453 = pneg %p237
      %p454 = pneg %p261
      %p455 = pneg %p258
      %p456 = pneg %p282
      %p457 = pneg %p279
      %p458 = pneg %p303
      %p459 = pneg %p300
      %p460 = pneg %p324
      %p461 = pneg %p321
      %p462 = pneg %p350
      %p463 = pneg %p347
      %p464 = scmp.lt.s32.totalorder %s25, 1
      %s465 = scalar_select %p464, %s25, 1
      %s466 = smul.addr %s465, 8
      %s467 = scalar_lea.vmem %s14, %s466
      %p468 = scmp.lt.s32.totalorder %s25, 1
      %s469 = scalar_select %p468, %s25, 1
      %s470 = smul.addr %s469, 8
      %s471 = scalar_lea.vmem %s0, %s470
      %p472 = scmp.lt.s32.totalorder %s25, 1
      %s473 = scalar_select %p472, %s25, 1
      %s474 = smul.addr %s473, 8
      %s475 = scalar_lea.vmem %s1, %s474
      %p476 = scmp.lt.s32.totalorder %s25, 1
      %s477 = scalar_select %p476, %s25, 1
      %s478 = smul.addr %s477, 8
      %s479 = scalar_lea.vmem %s14, %s478
      %v481 = vld [vmem:[%s471] sm:$0xff]
      %v482 = vld [vmem:[%s475] sm:$0xff]
      %v483 = vld [vmem:[%s2] sm:$0x1]
      %v484 = vld [vmem:[%s3] sm:$0x1]
      %vm485 = vcmask 261120
      %v486 = vsel %vm485, %v481, 0.0
      %487 = vadd.xlane.f32.xlu0 %v486
      %v488 = vpop.xlane.xlu0 %487
      %v489 = vrcp.pop 32.0
      %v490 = vmul.f32 %v488, %v489
      %v491 = vsub.f32 %v481, %v490
      %v492 = vmul.f32 %v491, %v491
      %v493 = vsel %vm485, %v492, 0.0
      %494 = vadd.xlane.f32.xlu0 %v493
      %v495 = vpop.xlane.xlu0 %494
      %v496 = vmul.f32 %v495, %v489
      %v497 = vadd.f32 %v496, 1e-12
      %v498 = vrsqrt.pop %v497
      %v499 = vmul.f32 %v491, %v498
      %v501 = vlaneseq
      %v502 = vshrl.u32 %v501, 7
      %v503 = vsub.s32 0, %v502
      %v504 = vrot.slane %v483, %v503
      %v506 = vmul.f32 %v504, %v499
      %v508 = vlaneseq
      %v509 = vshrl.u32 %v508, 7
      %v510 = vsub.s32 0, %v509
      %v511 = vrot.slane %v484, %v510
      %v513 = vadd.f32 %v506, %v511
      %v514 = vpack.c.bf16 %v513, %v513
      %v515 = vld [vmem:[%s4] sm:$0xf]
      %v516 = vld [vmem:[%s4 + $0x4] sm:$0xf]
      %v517 = vld [vmem:[%s4 + $0x8] sm:$0xf]
      %v518 = vld [vmem:[%s4 + $0xc] sm:$0xf]
      %v519 = vld [vmem:[%s5] sm:$0x1]
      %v521 = vlaneseq
      %v522 = vshrl.u32 %v521, 7
      %v523 = vsub.s32 0, %v522
      %v524 = vrot.slane %v519, %v523
      %v530 = vunpack.c.l.b16 %v515
      %v531 = vunpack.c.l.b16 %v516
      %v532 = vunpack.c.l.b16 %v517
      %v533 = vunpack.c.l.b16 %v518
      %v534 = vpack.c.b16 %v531, %v530
      %v535 = vpack.c.b16 %v533, %v532
      %v539 = vsel %vm485, %v514, 0
      %541 = vmatprep.subr.bf16.mxu0 0
      %542 = vmatpush1.bf16.msra.mxu0 0
      %543 = vmatprep.subr.bf16.mxu0 0
      %544 = vmatpush1.bf16.msra.mxu0 0
      %545 = vmatprep.subr.bf16.mxu0 0
      %546 = vmatpush1.bf16.msra.mxu0 0
      %547 = vmatprep.subr.bf16.mxu0 0
      %548 = vmatpush1.bf16.msra.mxu0 0
      %549 = vmatprep.subr.bf16.mxu0 0
      %550 = vmatpush1.bf16.msra.mxu0 0
      %551 = vmatprep.subr.bf16.mxu0 0
      %552 = vmatpush1.bf16.msra.mxu0 0
      %553 = vmatprep.subr.bf16.mxu0 0
      %554 = vmatpush1.bf16.msra.mxu0 %v535
      %555 = vmatprep.subr.bf16.mxu0 0
      %556 = vmatpush1.bf16.msra.mxu0 %v534
      %557 = vmatprep.subr.bf16.mxu0 0
      %558 = vmatpush2.bf16.msra.mxu0 0
      %559 = vmatprep.subr.bf16.mxu0 0
      %560 = vmatpush2.bf16.msra.mxu0 0
      %561 = vmatprep.subr.bf16.mxu0 0
      %562 = vmatpush2.bf16.msra.mxu0 0
      %563 = vmatprep.subr.bf16.mxu0 0
      %564 = vmatpush2.bf16.msra.mxu0 0
      %565 = vmatprep.subr.bf16.mxu0 0
      %566 = vmatpush2.bf16.msra.mxu0 0
      %567 = vmatprep.subr.bf16.mxu0 0
      %568 = vmatpush2.bf16.msra.mxu0 0
      %569 = vmatprep.subr.bf16.mxu0 0
      %570 = vmatpush2.bf16.msra.mxu0 0
      %571 = vmatprep.subr.bf16.mxu0 0
      %572 = vmatpush2.bf16.msra.mxu0 0
      %573 = vmatprep.mubr.bf16.mxu0 0
      %574 = vmatmul.mubr.bf16.gmra.mxu0 %v539
      %v575 = vpop.f32.mrf.mxu0
      %v576 = vadd.f32 %v524, %v575
      %v577 = vpop.f32.mrf.mxu0
      %v578 = vpop.f32.mrf.mxu0
      %v579 = vpop.f32.mrf.mxu0
      %580 = vdwg.mxu0
      %v581 = vmul.f32 %v576, 0.35355338
      %583 = vrot.lane.b32.xlu0 %v581, 120
      %v584 = vpop.permute.xlu0 %583
      %586 = vrot.lane.b32.xlu0 %v581, 112
      %v587 = vpop.permute.xlu0 %586
      %589 = vrot.lane.b32.xlu0 %v581, 104
      %v590 = vpop.permute.xlu0 %589
      %v592 = vpack.c.bf16 %v581, %v581
      %v593 = vpack.c.bf16 %v584, %v584
      %v594 = vpack.c.bf16 %v587, %v587
      %v595 = vpack.c.bf16 %v590, %v590
      %597 = vrot.lane.b32.xlu0 %v576, 120
      %v598 = vpop.permute.xlu0 %597
      %600 = vrot.lane.b32.xlu0 %v576, 112
      %v601 = vpop.permute.xlu0 %600
      %603 = vrot.lane.b32.xlu0 %v576, 104
      %v604 = vpop.permute.xlu0 %603
      %v606 = vpack.c.bf16 %v576, %v576
      %v607 = vpack.c.bf16 %v598, %v598
      %v608 = vpack.c.bf16 %v601, %v601
      %v609 = vpack.c.bf16 %v604, %v604
      %611 = vrot.lane.b32.xlu0 %v606, 96
      %v612 = vpop.permute.xlu0 %611
      %vm613 = vcmask 64512
      %v615 = vsel %vm613, %v592, 0
      %v618 = vsel %vm613, %v612, 0
      %620 = vmatprep.subr.bf16.mxu0 0
      %621 = vmatpush1.bf16.xpose.msra.mxu0 0
      %622 = vmatprep.subr.bf16.mxu0 0
      %623 = vmatpush1.bf16.xpose.msra.mxu0 0
      %624 = vmatprep.subr.bf16.mxu0 0
      %625 = vmatpush1.bf16.xpose.msra.mxu0 0
      %626 = vmatprep.subr.bf16.mxu0 0
      %627 = vmatpush1.bf16.xpose.msra.mxu0 0
      %628 = vmatprep.subr.bf16.mxu0 0
      %629 = vmatpush1.bf16.xpose.msra.mxu0 0
      %630 = vmatprep.subr.bf16.mxu0 0
      %631 = vmatpush1.bf16.xpose.msra.mxu0 0
      %632 = vmatprep.subr.bf16.mxu0 0
      %633 = vmatpush1.bf16.xpose.msra.mxu0 0
      %634 = vmatprep.subr.bf16.mxu0 0
      %635 = vmatpush1.bf16.xpose.msra.mxu0 %v618
      %636 = vmatprep.subr.bf16.mxu0 0
      %637 = vmatpush2.bf16.xpose.msra.mxu0 0
      %638 = vmatprep.subr.bf16.mxu0 0
      %639 = vmatpush2.bf16.xpose.msra.mxu0 0
      %640 = vmatprep.subr.bf16.mxu0 0
      %641 = vmatpush2.bf16.xpose.msra.mxu0 0
      %642 = vmatprep.subr.bf16.mxu0 0
      %643 = vmatpush2.bf16.xpose.msra.mxu0 0
      %644 = vmatprep.subr.bf16.mxu0 0
      %645 = vmatpush2.bf16.xpose.msra.mxu0 0
      %646 = vmatprep.subr.bf16.mxu0 0
      %647 = vmatpush2.bf16.xpose.msra.mxu0 0
      %648 = vmatprep.subr.bf16.mxu0 0
      %649 = vmatpush2.bf16.xpose.msra.mxu0 0
      %650 = vmatprep.subr.bf16.mxu0 0
      %651 = vmatpush2.bf16.xpose.msra.mxu0 0
      %652 = vmatprep.mubr.bf16.mxu0 0
      %653 = vmatmul.mubr.bf16.gmra.mxu0 %v615
      %v654 = vpop.f32.mrf.mxu0
      %v655 = vadd.f32 %v482, %v654
      %v656 = vpop.f32.mrf.mxu0
      %v657 = vpop.f32.mrf.mxu0
      %v658 = vpop.f32.mrf.mxu0
      %659 = vdwg.mxu0
      %661 = vrot.lane.b32.xlu0 %v607, 96
      %v662 = vpop.permute.xlu0 %661
      %v664 = vsel %vm613, %v593, 0
      %v667 = vsel %vm613, %v662, 0
      %669 = vmatprep.subr.bf16.mxu0 0
      %670 = vmatpush1.bf16.xpose.msra.mxu0 0
      %671 = vmatprep.subr.bf16.mxu0 0
      %672 = vmatpush1.bf16.xpose.msra.mxu0 0
      %673 = vmatprep.subr.bf16.mxu0 0
      %674 = vmatpush1.bf16.xpose.msra.mxu0 0
      %675 = vmatprep.subr.bf16.mxu0 0
      %676 = vmatpush1.bf16.xpose.msra.mxu0 0
      %677 = vmatprep.subr.bf16.mxu0 0
      %678 = vmatpush1.bf16.xpose.msra.mxu0 0
      %679 = vmatprep.subr.bf16.mxu0 0
      %680 = vmatpush1.bf16.xpose.msra.mxu0 0
      %681 = vmatprep.subr.bf16.mxu0 0
      %682 = vmatpush1.bf16.xpose.msra.mxu0 0
      %683 = vmatprep.subr.bf16.mxu0 0
      %684 = vmatpush1.bf16.xpose.msra.mxu0 %v667
      %685 = vmatprep.subr.bf16.mxu0 0
      %686 = vmatpush2.bf16.xpose.msra.mxu0 0
      %687 = vmatprep.subr.bf16.mxu0 0
      %688 = vmatpush2.bf16.xpose.msra.mxu0 0
      %689 = vmatprep.subr.bf16.mxu0 0
      %690 = vmatpush2.bf16.xpose.msra.mxu0 0
      %691 = vmatprep.subr.bf16.mxu0 0
      %692 = vmatpush2.bf16.xpose.msra.mxu0 0
      %693 = vmatprep.subr.bf16.mxu0 0
      %694 = vmatpush2.bf16.xpose.msra.mxu0 0
      %695 = vmatprep.subr.bf16.mxu0 0
      %696 = vmatpush2.bf16.xpose.msra.mxu0 0
      %697 = vmatprep.subr.bf16.mxu0 0
      %698 = vmatpush2.bf16.xpose.msra.mxu0 0
      %699 = vmatprep.subr.bf16.mxu0 0
      %700 = vmatpush2.bf16.xpose.msra.mxu0 0
      %701 = vmatprep.mubr.bf16.mxu0 0
      %702 = vmatmul.mubr.bf16.gmra.mxu0 %v664
      %v703 = vpop.f32.mrf.mxu0
      %v704 = vadd.f32 %v482, %v703
      %v705 = vpop.f32.mrf.mxu0
      %v706 = vpop.f32.mrf.mxu0
      %v707 = vpop.f32.mrf.mxu0
      %708 = vdwg.mxu0
      %710 = vrot.lane.b32.xlu0 %v608, 96
      %v711 = vpop.permute.xlu0 %710
      %v713 = vsel %vm613, %v594, 0
      %v716 = vsel %vm613, %v711, 0
      %718 = vmatprep.subr.bf16.mxu0 0
      %719 = vmatpush1.bf16.xpose.msra.mxu0 0
      %720 = vmatprep.subr.bf16.mxu0 0
      %721 = vmatpush1.bf16.xpose.msra.mxu0 0
      %722 = vmatprep.subr.bf16.mxu0 0
      %723 = vmatpush1.bf16.xpose.msra.mxu0 0
      %724 = vmatprep.subr.bf16.mxu0 0
      %725 = vmatpush1.bf16.xpose.msra.mxu0 0
      %726 = vmatprep.subr.bf16.mxu0 0
      %727 = vmatpush1.bf16.xpose.msra.mxu0 0
      %728 = vmatprep.subr.bf16.mxu0 0
      %729 = vmatpush1.bf16.xpose.msra.mxu0 0
      %730 = vmatprep.subr.bf16.mxu0 0
      %731 = vmatpush1.bf16.xpose.msra.mxu0 0
      %732 = vmatprep.subr.bf16.mxu0 0
      %733 = vmatpush1.bf16.xpose.msra.mxu0 %v716
      %734 = vmatprep.subr.bf16.mxu0 0
      %735 = vmatpush2.bf16.xpose.msra.mxu0 0
      %736 = vmatprep.subr.bf16.mxu0 0
      %737 = vmatpush2.bf16.xpose.msra.mxu0 0
      %738 = vmatprep.subr.bf16.mxu0 0
      %739 = vmatpush2.bf16.xpose.msra.mxu0 0
      %740 = vmatprep.subr.bf16.mxu0 0
      %741 = vmatpush2.bf16.xpose.msra.mxu0 0
      %742 = vmatprep.subr.bf16.mxu0 0
      %743 = vmatpush2.bf16.xpose.msra.mxu0 0
      %744 = vmatprep.subr.bf16.mxu0 0
      %745 = vmatpush2.bf16.xpose.msra.mxu0 0
      %746 = vmatprep.subr.bf16.mxu0 0
      %747 = vmatpush2.bf16.xpose.msra.mxu0 0
      %748 = vmatprep.subr.bf16.mxu0 0
      %749 = vmatpush2.bf16.xpose.msra.mxu0 0
      %750 = vmatprep.mubr.bf16.mxu0 0
      %751 = vmatmul.mubr.bf16.gmra.mxu0 %v713
      %v752 = vpop.f32.mrf.mxu0
      %v753 = vadd.f32 %v482, %v752
      %v754 = vpop.f32.mrf.mxu0
      %v755 = vpop.f32.mrf.mxu0
      %v756 = vpop.f32.mrf.mxu0
      %757 = vdwg.mxu0
      %759 = vrot.lane.b32.xlu0 %v609, 96
      %v760 = vpop.permute.xlu0 %759
      %v762 = vsel %vm613, %v595, 0
      %v765 = vsel %vm613, %v760, 0
      %767 = vmatprep.subr.bf16.mxu0 0
      %768 = vmatpush1.bf16.xpose.msra.mxu0 0
      %769 = vmatprep.subr.bf16.mxu0 0
      %770 = vmatpush1.bf16.xpose.msra.mxu0 0
      %771 = vmatprep.subr.bf16.mxu0 0
      %772 = vmatpush1.bf16.xpose.msra.mxu0 0
      %773 = vmatprep.subr.bf16.mxu0 0
      %774 = vmatpush1.bf16.xpose.msra.mxu0 0
      %775 = vmatprep.subr.bf16.mxu0 0
      %776 = vmatpush1.bf16.xpose.msra.mxu0 0
      %777 = vmatprep.subr.bf16.mxu0 0
      %778 = vmatpush1.bf16.xpose.msra.mxu0 0
      %779 = vmatprep.subr.bf16.mxu0 0
      %780 = vmatpush1.bf16.xpose.msra.mxu0 0
      %781 = vmatprep.subr.bf16.mxu0 0
      %782 = vmatpush1.bf16.xpose.msra.mxu0 %v765
      %783 = vmatprep.subr.bf16.mxu0 0
      %784 = vmatpush2.bf16.xpose.msra.mxu0 0
      %785 = vmatprep.subr.bf16.mxu0 0
      %786 = vmatpush2.bf16.xpose.msra.mxu0 0
      %787 = vmatprep.subr.bf16.mxu0 0
      %788 = vmatpush2.bf16.xpose.msra.mxu0 0
      %789 = vmatprep.subr.bf16.mxu0 0
      %790 = vmatpush2.bf16.xpose.msra.mxu0 0
      %791 = vmatprep.subr.bf16.mxu0 0
      %792 = vmatpush2.bf16.xpose.msra.mxu0 0
      %793 = vmatprep.subr.bf16.mxu0 0
      %794 = vmatpush2.bf16.xpose.msra.mxu0 0
      %795 = vmatprep.subr.bf16.mxu0 0
      %796 = vmatpush2.bf16.xpose.msra.mxu0 0
      %797 = vmatprep.subr.bf16.mxu0 0
      %798 = vmatpush2.bf16.xpose.msra.mxu0 0
      %799 = vmatprep.mubr.bf16.mxu0 0
      %800 = vmatmul.mubr.bf16.gmra.mxu0 %v762
      %v801 = vpop.f32.mrf.mxu0
      %v802 = vadd.f32 %v482, %v801
      %v803 = vpop.f32.mrf.mxu0
      %v804 = vpop.f32.mrf.mxu0
      %v805 = vpop.f32.mrf.mxu0
      %806 = vdwg.mxu0
      %v807 = vsel %vm613, %v655, -inf
      %808 = vmax.xlane.f32.xlu0 %v807
      %v809 = vpop.xlane.xlu0 %808
      %v810 = vsel %vm613, %v704, -inf
      %811 = vmax.xlane.f32.xlu0 %v810
      %v812 = vpop.xlane.xlu0 %811
      %v813 = vsel %vm613, %v753, -inf
      %814 = vmax.xlane.f32.xlu0 %v813
      %v815 = vpop.xlane.xlu0 %814
      %v816 = vsel %vm613, %v802, -inf
      %817 = vmax.xlane.f32.xlu0 %v816
      %v818 = vpop.xlane.xlu0 %817
      %v819 = vsub.f32 %v655, %v809
      %v820 = vsub.f32 %v704, %v812
      %v821 = vsub.f32 %v753, %v815
      %v822 = vsub.f32 %v802, %v818
      %v823 = vmul.f32 %v819, 1.442695
      %v824 = vpow.pop %v823
      %v825 = vmul.f32 %v820, 1.442695
      %v826 = vpow.pop %v825
      %v827 = vmul.f32 %v821, 1.442695
      %v828 = vpow.pop %v827
      %v829 = vmul.f32 %v822, 1.442695
      %v830 = vpow.pop %v829
      %v831 = vsel %vm613, %v824, 0.0
      %832 = vadd.xlane.f32.xlu0 %v831
      %v833 = vpop.xlane.xlu0 %832
      %v834 = vsel %vm613, %v826, 0.0
      %835 = vadd.xlane.f32.xlu0 %v834
      %v836 = vpop.xlane.xlu0 %835
      %v837 = vsel %vm613, %v828, 0.0
      %838 = vadd.xlane.f32.xlu0 %v837
      %v839 = vpop.xlane.xlu0 %838
      %v840 = vsel %vm613, %v830, 0.0
      %841 = vadd.xlane.f32.xlu0 %v840
      %v842 = vpop.xlane.xlu0 %841
      %v843 = vrcp.pop %v833
      %v844 = vrcp.pop %v836
      %v845 = vrcp.pop %v839
      %v846 = vrcp.pop %v842
      %v847 = vmul.f32 %v824, %v843
      %v848 = vmul.f32 %v826, %v844
      %v849 = vmul.f32 %v828, %v845
      %v850 = vmul.f32 %v830, %v846
      %v851 = vpack.c.bf16 %v847, %v847
      %v852 = vpack.c.bf16 %v848, %v848
      %v853 = vpack.c.bf16 %v849, %v849
      %v854 = vpack.c.bf16 %v850, %v850
      %855 = vrot.lane.b32.xlu0 %v606, 64
      %v856 = vpop.permute.xlu0 %855
      %v858 = vsel %vm613, %v851, 0
      %vm860 = vcmask 1043456
      %v862 = vsel %vm860, %v856, 0
      %864 = vmatprep.subr.bf16.mxu0 0
      %865 = vmatpush1.bf16.msra.mxu0 0
      %866 = vmatprep.subr.bf16.mxu0 0
      %867 = vmatpush1.bf16.msra.mxu0 0
      %868 = vmatprep.subr.bf16.mxu0 0
      %869 = vmatpush1.bf16.msra.mxu0 0
      %870 = vmatprep.subr.bf16.mxu0 0
      %871 = vmatpush1.bf16.msra.mxu0 0
      %872 = vmatprep.subr.bf16.mxu0 0
      %873 = vmatpush1.bf16.msra.mxu0 0
      %874 = vmatprep.subr.bf16.mxu0 0
      %875 = vmatpush1.bf16.msra.mxu0 0
      %876 = vmatprep.subr.bf16.mxu0 0
      %877 = vmatpush1.bf16.msra.mxu0 0
      %878 = vmatprep.subr.bf16.mxu0 0
      %879 = vmatpush1.bf16.msra.mxu0 %v862
      %880 = vmatprep.subr.bf16.mxu0 0
      %881 = vmatpush2.bf16.msra.mxu0 0
      %882 = vmatprep.subr.bf16.mxu0 0
      %883 = vmatpush2.bf16.msra.mxu0 0
      %884 = vmatprep.subr.bf16.mxu0 0
      %885 = vmatpush2.bf16.msra.mxu0 0
      %886 = vmatprep.subr.bf16.mxu0 0
      %887 = vmatpush2.bf16.msra.mxu0 0
      %888 = vmatprep.subr.bf16.mxu0 0
      %889 = vmatpush2.bf16.msra.mxu0 0
      %890 = vmatprep.subr.bf16.mxu0 0
      %891 = vmatpush2.bf16.msra.mxu0 0
      %892 = vmatprep.subr.bf16.mxu0 0
      %893 = vmatpush2.bf16.msra.mxu0 0
      %894 = vmatprep.subr.bf16.mxu0 0
      %895 = vmatpush2.bf16.msra.mxu0 0
      %896 = vmatprep.mubr.bf16.mxu0 0
      %897 = vmatmul.mubr.bf16.gmra.mxu0 %v858
      %v898 = vpop.f32.mrf.mxu0
      %v899 = vadd.f32 0.0, %v898
      %v900 = vpop.f32.mrf.mxu0
      %v901 = vpop.f32.mrf.mxu0
      %v902 = vpop.f32.mrf.mxu0
      %903 = vdwg.mxu0
      %904 = vrot.lane.b32.xlu0 %v607, 64
      %v905 = vpop.permute.xlu0 %904
      %v907 = vsel %vm613, %v852, 0
      %v910 = vsel %vm860, %v905, 0
      %912 = vmatprep.subr.bf16.mxu0 0
      %913 = vmatpush1.bf16.msra.mxu0 0
      %914 = vmatprep.subr.bf16.mxu0 0
      %915 = vmatpush1.bf16.msra.mxu0 0
      %916 = vmatprep.subr.bf16.mxu0 0
      %917 = vmatpush1.bf16.msra.mxu0 0
      %918 = vmatprep.subr.bf16.mxu0 0
      %919 = vmatpush1.bf16.msra.mxu0 0
      %920 = vmatprep.subr.bf16.mxu0 0
      %921 = vmatpush1.bf16.msra.mxu0 0
      %922 = vmatprep.subr.bf16.mxu0 0
      %923 = vmatpush1.bf16.msra.mxu0 0
      %924 = vmatprep.subr.bf16.mxu0 0
      %925 = vmatpush1.bf16.msra.mxu0 0
      %926 = vmatprep.subr.bf16.mxu0 0
      %927 = vmatpush1.bf16.msra.mxu0 %v910
      %928 = vmatprep.subr.bf16.mxu0 0
      %929 = vmatpush2.bf16.msra.mxu0 0
      %930 = vmatprep.subr.bf16.mxu0 0
      %931 = vmatpush2.bf16.msra.mxu0 0
      %932 = vmatprep.subr.bf16.mxu0 0
      %933 = vmatpush2.bf16.msra.mxu0 0
      %934 = vmatprep.subr.bf16.mxu0 0
      %935 = vmatpush2.bf16.msra.mxu0 0
      %936 = vmatprep.subr.bf16.mxu0 0
      %937 = vmatpush2.bf16.msra.mxu0 0
      %938 = vmatprep.subr.bf16.mxu0 0
      %939 = vmatpush2.bf16.msra.mxu0 0
      %940 = vmatprep.subr.bf16.mxu0 0
      %941 = vmatpush2.bf16.msra.mxu0 0
      %942 = vmatprep.subr.bf16.mxu0 0
      %943 = vmatpush2.bf16.msra.mxu0 0
      %944 = vmatprep.mubr.bf16.mxu0 0
      %945 = vmatmul.mubr.bf16.gmra.mxu0 %v907
      %v946 = vpop.f32.mrf.mxu0
      %v947 = vadd.f32 0.0, %v946
      %v948 = vpop.f32.mrf.mxu0
      %v949 = vpop.f32.mrf.mxu0
      %v950 = vpop.f32.mrf.mxu0
      %951 = vdwg.mxu0
      %952 = vrot.lane.b32.xlu0 %v608, 64
      %v953 = vpop.permute.xlu0 %952
      %v955 = vsel %vm613, %v853, 0
      %v958 = vsel %vm860, %v953, 0
      %960 = vmatprep.subr.bf16.mxu0 0
      %961 = vmatpush1.bf16.msra.mxu0 0
      %962 = vmatprep.subr.bf16.mxu0 0
      %963 = vmatpush1.bf16.msra.mxu0 0
      %964 = vmatprep.subr.bf16.mxu0 0
      %965 = vmatpush1.bf16.msra.mxu0 0
      %966 = vmatprep.subr.bf16.mxu0 0
      %967 = vmatpush1.bf16.msra.mxu0 0
      %968 = vmatprep.subr.bf16.mxu0 0
      %969 = vmatpush1.bf16.msra.mxu0 0
      %970 = vmatprep.subr.bf16.mxu0 0
      %971 = vmatpush1.bf16.msra.mxu0 0
      %972 = vmatprep.subr.bf16.mxu0 0
      %973 = vmatpush1.bf16.msra.mxu0 0
      %974 = vmatprep.subr.bf16.mxu0 0
      %975 = vmatpush1.bf16.msra.mxu0 %v958
      %976 = vmatprep.subr.bf16.mxu0 0
      %977 = vmatpush2.bf16.msra.mxu0 0
      %978 = vmatprep.subr.bf16.mxu0 0
      %979 = vmatpush2.bf16.msra.mxu0 0
      %980 = vmatprep.subr.bf16.mxu0 0
      %981 = vmatpush2.bf16.msra.mxu0 0
      %982 = vmatprep.subr.bf16.mxu0 0
      %983 = vmatpush2.bf16.msra.mxu0 0
      %984 = vmatprep.subr.bf16.mxu0 0
      %985 = vmatpush2.bf16.msra.mxu0 0
      %986 = vmatprep.subr.bf16.mxu0 0
      %987 = vmatpush2.bf16.msra.mxu0 0
      %988 = vmatprep.subr.bf16.mxu0 0
      %989 = vmatpush2.bf16.msra.mxu0 0
      %990 = vmatprep.subr.bf16.mxu0 0
      %991 = vmatpush2.bf16.msra.mxu0 0
      %992 = vmatprep.mubr.bf16.mxu0 0
      %993 = vmatmul.mubr.bf16.gmra.mxu0 %v955
      %v994 = vpop.f32.mrf.mxu0
      %v995 = vadd.f32 0.0, %v994
      %v996 = vpop.f32.mrf.mxu0
      %v997 = vpop.f32.mrf.mxu0
      %v998 = vpop.f32.mrf.mxu0
      %999 = vdwg.mxu0
      %1000 = vrot.lane.b32.xlu0 %v609, 64
      %v1001 = vpop.permute.xlu0 %1000
      %v1003 = vsel %vm613, %v854, 0
      %v1006 = vsel %vm860, %v1001, 0
      %1008 = vmatprep.subr.bf16.mxu0 0
      %1009 = vmatpush1.bf16.msra.mxu0 0
      %1010 = vmatprep.subr.bf16.mxu0 0
      %1011 = vmatpush1.bf16.msra.mxu0 0
      %1012 = vmatprep.subr.bf16.mxu0 0
      %1013 = vmatpush1.bf16.msra.mxu0 0
      %1014 = vmatprep.subr.bf16.mxu0 0
      %1015 = vmatpush1.bf16.msra.mxu0 0
      %1016 = vmatprep.subr.bf16.mxu0 0
      %1017 = vmatpush1.bf16.msra.mxu0 0
      %1018 = vmatprep.subr.bf16.mxu0 0
      %1019 = vmatpush1.bf16.msra.mxu0 0
      %1020 = vmatprep.subr.bf16.mxu0 0
      %1021 = vmatpush1.bf16.msra.mxu0 0
      %1022 = vmatprep.subr.bf16.mxu0 0
      %1023 = vmatpush1.bf16.msra.mxu0 %v1006
      %1024 = vmatprep.subr.bf16.mxu0 0
      %1025 = vmatpush2.bf16.msra.mxu0 0
      %1026 = vmatprep.subr.bf16.mxu0 0
      %1027 = vmatpush2.bf16.msra.mxu0 0
      %1028 = vmatprep.subr.bf16.mxu0 0
      %1029 = vmatpush2.bf16.msra.mxu0 0
      %1030 = vmatprep.subr.bf16.mxu0 0
      %1031 = vmatpush2.bf16.msra.mxu0 0
      %1032 = vmatprep.subr.bf16.mxu0 0
      %1033 = vmatpush2.bf16.msra.mxu0 0
      %1034 = vmatprep.subr.bf16.mxu0 0
      %1035 = vmatpush2.bf16.msra.mxu0 0
      %1036 = vmatprep.subr.bf16.mxu0 0
      %1037 = vmatpush2.bf16.msra.mxu0 0
      %1038 = vmatprep.subr.bf16.mxu0 0
      %1039 = vmatpush2.bf16.msra.mxu0 0
      %1040 = vmatprep.mubr.bf16.mxu0 0
      %1041 = vmatmul.mubr.bf16.gmra.mxu0 %v1003
      %v1042 = vpop.f32.mrf.mxu0
      %v1043 = vadd.f32 0.0, %v1042
      %v1044 = vpop.f32.mrf.mxu0
      %v1045 = vpop.f32.mrf.mxu0
      %v1046 = vpop.f32.mrf.mxu0
      %1047 = vdwg.mxu0
      %1049 = vrot.lane.b32.xlu0 %v947, 8
      %v1050 = vpop.permute.xlu0 %1049
      %1053 = vrot.lane.b32.xlu0 %v995, 16
      %v1054 = vpop.permute.xlu0 %1053
      %1057 = vrot.lane.b32.xlu0 %v1043, 24
      %v1058 = vpop.permute.xlu0 %1057
      %v1060 = vsel %vm613, %v899, %v1050
      %vm1061 = vcmask 130048
      %v1062 = vsel %vm1061, %v1060, %v1054
      %vm1063 = vcmask 195584
      %v1064 = vsel %vm1063, %v1062, %v1058
      %v1065 = vpack.c.bf16 %v1064, %v1064
      %v1066 = vld [vmem:[%s6] sm:$0xf]
      %v1067 = vld [vmem:[%s6 + $0x4] sm:$0xf]
      %v1068 = vld [vmem:[%s6 + $0x8] sm:$0xf]
      %v1069 = vld [vmem:[%s6 + $0xc] sm:$0xf]
      %v1070 = vld [vmem:[%s7] sm:$0x1]
      %v1072 = vlaneseq
      %v1073 = vshrl.u32 %v1072, 7
      %v1074 = vsub.s32 0, %v1073
      %v1075 = vrot.slane %v1070, %v1074
      %v1081 = vunpack.c.l.b16 %v1066
      %v1082 = vunpack.c.l.b16 %v1067
      %v1083 = vunpack.c.l.b16 %v1068
      %v1084 = vunpack.c.l.b16 %v1069
      %v1085 = vpack.c.b16 %v1082, %v1081
      %v1086 = vpack.c.b16 %v1084, %v1083
      %v1090 = vsel %vm485, %v1065, 0
      %1092 = vmatprep.subr.bf16.mxu0 0
      %1093 = vmatpush1.bf16.msra.mxu0 0
      %1094 = vmatprep.subr.bf16.mxu0 0
      %1095 = vmatpush1.bf16.msra.mxu0 0
      %1096 = vmatprep.subr.bf16.mxu0 0
      %1097 = vmatpush1.bf16.msra.mxu0 0
      %1098 = vmatprep.subr.bf16.mxu0 0
      %1099 = vmatpush1.bf16.msra.mxu0 0
      %1100 = vmatprep.subr.bf16.mxu0 0
      %1101 = vmatpush1.bf16.msra.mxu0 0
      %1102 = vmatprep.subr.bf16.mxu0 0
      %1103 = vmatpush1.bf16.msra.mxu0 0
      %1104 = vmatprep.subr.bf16.mxu0 0
      %1105 = vmatpush1.bf16.msra.mxu0 %v1086
      %1106 = vmatprep.subr.bf16.mxu0 0
      %1107 = vmatpush1.bf16.msra.mxu0 %v1085
      %1108 = vmatprep.subr.bf16.mxu0 0
      %1109 = vmatpush2.bf16.msra.mxu0 0
      %1110 = vmatprep.subr.bf16.mxu0 0
      %1111 = vmatpush2.bf16.msra.mxu0 0
      %1112 = vmatprep.subr.bf16.mxu0 0
      %1113 = vmatpush2.bf16.msra.mxu0 0
      %1114 = vmatprep.subr.bf16.mxu0 0
      %1115 = vmatpush2.bf16.msra.mxu0 0
      %1116 = vmatprep.subr.bf16.mxu0 0
      %1117 = vmatpush2.bf16.msra.mxu0 0
      %1118 = vmatprep.subr.bf16.mxu0 0
      %1119 = vmatpush2.bf16.msra.mxu0 0
      %1120 = vmatprep.subr.bf16.mxu0 0
      %1121 = vmatpush2.bf16.msra.mxu0 0
      %1122 = vmatprep.subr.bf16.mxu0 0
      %1123 = vmatpush2.bf16.msra.mxu0 0
      %1124 = vmatprep.mubr.bf16.mxu0 0
      %1125 = vmatmul.mubr.bf16.gmra.mxu0 %v1090
      %v1126 = vpop.f32.mrf.mxu0
      %v1127 = vadd.f32 %v1075, %v1126
      %v1128 = vpop.f32.mrf.mxu0
      %v1129 = vpop.f32.mrf.mxu0
      %v1130 = vpop.f32.mrf.mxu0
      %1131 = vdwg.mxu0
      %v1132 = vadd.f32 %v481, %v1127
      %v1133 = vld [vmem:[%s8] sm:$0x1]
      %v1134 = vld [vmem:[%s9] sm:$0x1]
      %v1135 = vsel %vm485, %v1132, 0.0
      %1136 = vadd.xlane.f32.xlu0 %v1135
      %v1137 = vpop.xlane.xlu0 %1136
      %v1138 = vmul.f32 %v1137, %v489
      %v1139 = vsub.f32 %v1132, %v1138
      %v1140 = vmul.f32 %v1139, %v1139
      %v1141 = vsel %vm485, %v1140, 0.0
      %1142 = vadd.xlane.f32.xlu0 %v1141
      %v1143 = vpop.xlane.xlu0 %1142
      %v1144 = vmul.f32 %v1143, %v489
      %v1145 = vadd.f32 %v1144, 1e-12
      %v1146 = vrsqrt.pop %v1145
      %v1147 = vmul.f32 %v1139, %v1146
      %v1149 = vlaneseq
      %v1150 = vshrl.u32 %v1149, 7
      %v1151 = vsub.s32 0, %v1150
      %v1152 = vrot.slane %v1133, %v1151
      %v1154 = vmul.f32 %v1152, %v1147
      %v1156 = vlaneseq
      %v1157 = vshrl.u32 %v1156, 7
      %v1158 = vsub.s32 0, %v1157
      %v1159 = vrot.slane %v1134, %v1158
      %v1161 = vadd.f32 %v1154, %v1159
      %v1162 = vpack.c.bf16 %v1161, %v1161
      %v1163 = vld [vmem:[%s10] sm:$0xf]
      %v1164 = vld [vmem:[%s10 + $0x4] sm:$0xf]
      %v1165 = vld [vmem:[%s10 + $0x8] sm:$0xf]
      %v1166 = vld [vmem:[%s10 + $0xc] sm:$0xf]
      %v1167 = vld [vmem:[%s11] sm:$0x1]
      %v1169 = vlaneseq
      %v1170 = vshrl.u32 %v1169, 7
      %v1171 = vsub.s32 0, %v1170
      %v1172 = vrot.slane %v1167, %v1171
      %v1178 = vunpack.c.l.b16 %v1163
      %v1179 = vunpack.c.l.b16 %v1164
      %v1180 = vunpack.c.l.b16 %v1165
      %v1181 = vunpack.c.l.b16 %v1166
      %v1182 = vpack.c.b16 %v1179, %v1178
      %v1183 = vpack.c.b16 %v1181, %v1180
      %v1187 = vsel %vm485, %v1162, 0
      %1189 = vmatprep.subr.bf16.mxu0 0
      %1190 = vmatpush1.bf16.msra.mxu0 0
      %1191 = vmatprep.subr.bf16.mxu0 0
      %1192 = vmatpush1.bf16.msra.mxu0 0
      %1193 = vmatprep.subr.bf16.mxu0 0
      %1194 = vmatpush1.bf16.msra.mxu0 0
      %1195 = vmatprep.subr.bf16.mxu0 0
      %1196 = vmatpush1.bf16.msra.mxu0 0
      %1197 = vmatprep.subr.bf16.mxu0 0
      %1198 = vmatpush1.bf16.msra.mxu0 0
      %1199 = vmatprep.subr.bf16.mxu0 0
      %1200 = vmatpush1.bf16.msra.mxu0 0
      %1201 = vmatprep.subr.bf16.mxu0 0
      %1202 = vmatpush1.bf16.msra.mxu0 %v1183
      %1203 = vmatprep.subr.bf16.mxu0 0
      %1204 = vmatpush1.bf16.msra.mxu0 %v1182
      %1205 = vmatprep.subr.bf16.mxu0 0
      %1206 = vmatpush2.bf16.msra.mxu0 0
      %1207 = vmatprep.subr.bf16.mxu0 0
      %1208 = vmatpush2.bf16.msra.mxu0 0
      %1209 = vmatprep.subr.bf16.mxu0 0
      %1210 = vmatpush2.bf16.msra.mxu0 0
      %1211 = vmatprep.subr.bf16.mxu0 0
      %1212 = vmatpush2.bf16.msra.mxu0 0
      %1213 = vmatprep.subr.bf16.mxu0 0
      %1214 = vmatpush2.bf16.msra.mxu0 0
      %1215 = vmatprep.subr.bf16.mxu0 0
      %1216 = vmatpush2.bf16.msra.mxu0 0
      %1217 = vmatprep.subr.bf16.mxu0 0
      %1218 = vmatpush2.bf16.msra.mxu0 0
      %1219 = vmatprep.subr.bf16.mxu0 0
      %1220 = vmatpush2.bf16.msra.mxu0 0
      %1221 = vmatprep.mubr.bf16.mxu0 0
      %1222 = vmatmul.mubr.bf16.gmra.mxu0 %v1187
      %v1223 = vpop.f32.mrf.mxu0
      %v1224 = vadd.f32 %v1172, %v1223
      %v1225 = vpop.f32.mrf.mxu0
      %v1226 = vpop.f32.mrf.mxu0
      %v1227 = vpop.f32.mrf.mxu0
      %1228 = vdwg.mxu0
      %v1229 = vmul.f32 %v1224, 1.702
      %v1230 = vxor.u32 %v1229, 2147483648
      %v1231 = vmul.f32 %v1230, 1.442695
      %v1232 = vpow.pop %v1231
      %v1233 = vadd.f32 %v1232, 1.0
      %v1234 = vrcp.pop %v1233
      %v1235 = vmul.f32 1.0, %v1234
      %v1236 = vmul.f32 %v1224, %v1235
      %v1237 = vpack.c.bf16 %v1236, %v1236
      %v1238 = vld [vmem:[%s12] sm:$0xf]
      %v1239 = vld [vmem:[%s12 + $0x4] sm:$0xf]
      %v1240 = vld [vmem:[%s12 + $0x8] sm:$0xf]
      %v1241 = vld [vmem:[%s12 + $0xc] sm:$0xf]
      %v1242 = vld [vmem:[%s12 + $0x10] sm:$0xf]
      %v1243 = vld [vmem:[%s12 + $0x14] sm:$0xf]
      %v1244 = vld [vmem:[%s12 + $0x18] sm:$0xf]
      %v1245 = vld [vmem:[%s12 + $0x1c] sm:$0xf]
      %v1246 = vld [vmem:[%s12 + $0x20] sm:$0xf]
      %v1247 = vld [vmem:[%s12 + $0x24] sm:$0xf]
      %v1248 = vld [vmem:[%s12 + $0x28] sm:$0xf]
      %v1249 = vld [vmem:[%s12 + $0x2c] sm:$0xf]
      %v1250 = vld [vmem:[%s12 + $0x30] sm:$0xf]
      %v1251 = vld [vmem:[%s12 + $0x34] sm:$0xf]
      %v1252 = vld [vmem:[%s12 + $0x38] sm:$0xf]
      %v1253 = vld [vmem:[%s12 + $0x3c] sm:$0xf]
      %v1254 = vld [vmem:[%s13] sm:$0x1]
      %v1256 = vlaneseq
      %v1257 = vshrl.u32 %v1256, 7
      %v1258 = vsub.s32 0, %v1257
      %v1259 = vrot.slane %v1254, %v1258
      %v1277 = vunpack.c.l.b16 %v1238
      %v1278 = vunpack.c.l.b16 %v1239
      %v1279 = vunpack.c.l.b16 %v1240
      %v1280 = vunpack.c.l.b16 %v1241
      %v1281 = vunpack.c.l.b16 %v1242
      %v1282 = vunpack.c.l.b16 %v1243
      %v1283 = vunpack.c.l.b16 %v1244
      %v1284 = vunpack.c.l.b16 %v1245
      %v1285 = vunpack.c.l.b16 %v1246
      %v1286 = vunpack.c.l.b16 %v1247
      %v1287 = vunpack.c.l.b16 %v1248
      %v1288 = vunpack.c.l.b16 %v1249
      %v1289 = vunpack.c.l.b16 %v1250
      %v1290 = vunpack.c.l.b16 %v1251
      %v1291 = vunpack.c.l.b16 %v1252
      %v1292 = vunpack.c.l.b16 %v1253
      %v1293 = vpack.c.b16 %v1278, %v1277
      %v1294 = vpack.c.b16 %v1280, %v1279
      %v1295 = vpack.c.b16 %v1282, %v1281
      %v1296 = vpack.c.b16 %v1284, %v1283
      %v1297 = vpack.c.b16 %v1286, %v1285
      %v1298 = vpack.c.b16 %v1288, %v1287
      %v1299 = vpack.c.b16 %v1290, %v1289
      %v1300 = vpack.c.b16 %v1292, %v1291
      %1309 = vmatprep.subr.bf16.mxu0 0
      %1310 = vmatpush1.bf16.msra.mxu0 %v1300
      %1311 = vmatprep.subr.bf16.mxu0 0
      %1312 = vmatpush1.bf16.msra.mxu0 %v1299
      %1313 = vmatprep.subr.bf16.mxu0 0
      %1314 = vmatpush1.bf16.msra.mxu0 %v1298
      %1315 = vmatprep.subr.bf16.mxu0 0
      %1316 = vmatpush1.bf16.msra.mxu0 %v1297
      %1317 = vmatprep.subr.bf16.mxu0 0
      %1318 = vmatpush1.bf16.msra.mxu0 %v1296
      %1319 = vmatprep.subr.bf16.mxu0 0
      %1320 = vmatpush1.bf16.msra.mxu0 %v1295
      %1321 = vmatprep.subr.bf16.mxu0 0
      %1322 = vmatpush1.bf16.msra.mxu0 %v1294
      %1323 = vmatprep.subr.bf16.mxu0 0
      %1324 = vmatpush1.bf16.msra.mxu0 %v1293
      %1325 = vmatprep.subr.bf16.mxu0 0
      %1326 = vmatpush2.bf16.msra.mxu0 0
      %1327 = vmatprep.subr.bf16.mxu0 0
      %1328 = vmatpush2.bf16.msra.mxu0 0
      %1329 = vmatprep.subr.bf16.mxu0 0
      %1330 = vmatpush2.bf16.msra.mxu0 0
      %1331 = vmatprep.subr.bf16.mxu0 0
      %1332 = vmatpush2.bf16.msra.mxu0 0
      %1333 = vmatprep.subr.bf16.mxu0 0
      %1334 = vmatpush2.bf16.msra.mxu0 0
      %1335 = vmatprep.subr.bf16.mxu0 0
      %1336 = vmatpush2.bf16.msra.mxu0 0
      %1337 = vmatprep.subr.bf16.mxu0 0
      %1338 = vmatpush2.bf16.msra.mxu0 0
      %1339 = vmatprep.subr.bf16.mxu0 0
      %1340 = vmatpush2.bf16.msra.mxu0 0
      %1341 = vmatprep.mubr.bf16.mxu0 0
      %1342 = vmatmul.mubr.bf16.gmra.mxu0 %v1237
      %v1343 = vpop.f32.mrf.mxu0
      %v1344 = vadd.f32 %v1259, %v1343
      %v1345 = vpop.f32.mrf.mxu0
      %v1346 = vpop.f32.mrf.mxu0
      %v1347 = vpop.f32.mrf.mxu0
      %1348 = vdwg.mxu0
      %v1349 = vadd.f32 %v1132, %v1344
      %1350 = vst.msk [vmem:[%s479] sm:$0xff] %vm485, %v1349
      %p1351 = scmp.lt.s32.totalorder %s25, 1
      %s1352 = scalar_select %p1351, %s25, 1
      %s1353 = smul.addr %s1352, 8
      %s1354 = scalar_lea.vmem %s14, %s1353
      // Predicated region
      $region77: #{transformer_clip_forward.2} parent=75 // pred_check
        %p1355 = pneg %p347
      $region78: #{transformer_clip_forward.2} parent=75 // pred_check_branch
        %1357 = sbr.rel (%p1355) target = $region80
      $region79: #{transformer_clip_forward.2} parent=75 // pred_region
        _
      $region80: #{transformer_clip_forward.2} parent=75 // pred_fallthru
        _
    $region76: #{transformer_clip_forward.2} parent=5 // pred_fallthru
      _
    %p1358 = scmp.le.s32.totalorder 2, %s20
    // Predicated region
    $region81: #{transformer_clip_forward.2} parent=5 // pred_check
      %p1359 = pneg %p1358
    $region82: #{transformer_clip_forward.2} parent=5 // pred_check_branch
      %1361 = sbr.rel (%p1359) target = $region84
    $region83: #{transformer_clip_forward.2} parent=5 // pred_region
      %s1362 = ssub.s32 %s20, 2
      // Predicated region
      $region85: #{transformer_clip_forward.2} parent=83 // pred_check
        %p1363 = pneg %p353
      $region86: #{transformer_clip_forward.2} parent=83 // pred_check_branch
        %1365 = sbr.rel (%p1363) target = $region88
      $region87: #{transformer_clip_forward.2} parent=83 // pred_region
        %p1366 = scmp.lt.s32.totalorder %s26, 1
        %s1367 = scalar_select %p1366, %s26, 1
        %s1368 = smul.addr %s1367, 8
        %s1369 = scalar_lea.vmem %s14, %s1368
      $region88: #{transformer_clip_forward.2} parent=83 // pred_fallthru
        _
    $region84: #{transformer_clip_forward.2} parent=5 // pred_fallthru
      _
  $region6: #{transformer_clip_forward.2} parent=0 // loop_footer
    %s24 = sadd.s32 1, %s20
  $region7: #{transformer_clip_forward.2} parent=0 // loop_footer_branch
    %19 = sbr.rel target = $region3
  $region8: #{transformer_clip_forward.2} parent=0 // loop_exit
    _

</llo_original>
